<compile_context>
chip_gen: v7x
topology: tpu7x:2x2x1
jax: 0.10.0
libtpu: 0.0.40
codegen_flags: <defaults>
</compile_context>

<pallas_src>
import functools

import jax
import jax.numpy as jnp
from jax.experimental import pallas as pl
from jax.experimental.pallas import tpu as pltpu


def _downsample_conv_kernel(x_ref, w_ref, b_ref, o_ref, *, H_out, W_out, Hd):
    """One image per grid step.

    x_ref : (4*Hd, Wd, C)       space-to-depth padded input (parity-major rows)
    w_ref : (9, C, C_out)       per-tap matmul weights, tap index = ky*3 + kx
    b_ref : (1, C_out)          bias row
    o_ref : (H_out, W_out, C_out)
    """
    C = x_ref.shape[-1]
    C_out = o_ref.shape[-1]
    M = H_out * W_out

    acc = jnp.zeros((M, C_out), jnp.float32)
    # 3x3 taps, statically unrolled: each tap is a contiguous slice + MXU matmul.
    for ky in range(3):
        for kx in range(3):
            dy, dx = ky // 2, kx // 2
            parity = (ky % 2) * 2 + (kx % 2)
            r0 = parity * Hd + dy
            patch = x_ref[r0:r0 + H_out, dx:dx + W_out, :]     # (H_out, W_out, C)
            patch = patch.reshape(M, C)
            acc = acc + jnp.dot(patch, w_ref[ky * 3 + kx],
                                preferred_element_type=jnp.float32)

    acc = acc + b_ref[...]                    # bias, broadcast over rows
    acc = jnp.maximum(acc, 0.0)               # fused ReLU (inplace=True is a no-op here)
    o_ref[...] = acc.reshape(H_out, W_out, C_out).astype(o_ref.dtype)


def downsample(x, weight, bias=None):
    """Conv2d(C, 2C, kernel_size=3, stride=2, padding=1) + ReLU; NCHW in / NCHW out.

    x      : (B, C, H, W) float32, H and W even
    weight : (C_out, C, 3, 3)  (PyTorch OIHW layout)
    bias   : (C_out,) or None
    """
    B, C, H, W = x.shape
    C_out = weight.shape[0]
    assert H % 2 == 0 and W % 2 == 0, "stride-2 downsample expects even H, W"
    H_out, W_out = H // 2, W // 2
    Hd, Wd = H_out + 1, W_out + 1

    # --- wrapper-side layout glue (XLA): NCHW -> NHWC, zero-pad, space-to-depth ---
    x_nhwc = jnp.transpose(x, (0, 2, 3, 1)).astype(jnp.float32)
    x_pad = jnp.pad(x_nhwc, ((0, 0), (1, 1), (1, 1), (0, 0)))      # (B, 2Hd, 2Wd, C)
    # x_s2d[b, (2*pr+pc)*Hd + i, j, c] == x_pad[b, 2*i + pr, 2*j + pc, c]
    x_s2d = x_pad.reshape(B, Hd, 2, Wd, 2, C).transpose(0, 2, 4, 1, 3, 5)
    x_s2d = x_s2d.reshape(B, 4 * Hd, Wd, C)

    # conv weight (C_out, C, 3, 3) -> per-tap matmul weights (9, C, C_out)
    w_taps = jnp.transpose(weight, (2, 3, 1, 0)).reshape(9, C, C_out)
    w_taps = w_taps.astype(jnp.float32)
    if bias is None:
        bias = jnp.zeros((C_out,), jnp.float32)
    b_row = bias.reshape(1, C_out).astype(jnp.float32)

    out_nhwc = pl.pallas_call(
        functools.partial(_downsample_conv_kernel,
                          H_out=H_out, W_out=W_out, Hd=Hd),
        out_shape=jax.ShapeDtypeStruct((B, H_out, W_out, C_out), jnp.float32),
        grid=(B,),
        in_specs=[
            # one space-to-depth image per grid step
            pl.BlockSpec((None, 4 * Hd, Wd, C), lambda b: (b, 0, 0, 0)),
            # weights / bias: constant index_map -> DMA'd once, VMEM-resident
            pl.BlockSpec((9, C, C_out), lambda b: (0, 0, 0)),
            pl.BlockSpec((1, C_out), lambda b: (0, 0)),
        ],
        out_specs=pl.BlockSpec((None, H_out, W_out, C_out),
                               lambda b: (b, 0, 0, 0)),
        compiler_params=pltpu.CompilerParams(
            dimension_semantics=("parallel",)),
    )(x_s2d, w_taps, b_row)

    # NHWC -> NCHW to match the PyTorch module's output layout
    return jnp.transpose(out_nhwc, (0, 3, 1, 2))


if __name__ == "__main__":
    # DownSample(channel=4, bias=True), x: (B, C, H, W) = (2, 4, 16, 16)
    B, C, H, W = 2, 4, 16, 16
    C_out = 2 * C

    key = jax.random.PRNGKey(0)
    kx_, kw_, kb_ = jax.random.split(key, 3)
    x = jax.random.normal(kx_, (B, C, H, W), jnp.float32)
    weight = jax.random.normal(kw_, (C_out, C, 3, 3), jnp.float32) * 0.1
    bias = jax.random.normal(kb_, (C_out,), jnp.float32) * 0.1

    out = downsample(x, weight, bias)
    out = jax.block_until_ready(out)
    assert out.shape == (B, C_out, H // 2, W // 2)

    # correctness check against the XLA reference conv + ReLU
    ref = jax.lax.conv_general_dilated(
        x, weight, window_strides=(2, 2), padding=((1, 1), (1, 1)),
        dimension_numbers=("NCHW", "OIHW", "NCHW"))
    ref = jnp.maximum(ref + bias.reshape(1, C_out, 1, 1), 0.0)
    assert jnp.allclose(out, ref, rtol=1e-4, atol=1e-4), "mismatch vs XLA reference"

    print("KERNEL_OK")
</pallas_src>

<mosaic_0001>
module attributes {stable_mosaic.version = 11 : i64} {
  func.func @_downsample_conv_kernel(%arg0: i32, %arg1: memref<1x36x9x4xf32, #tpu.memory_space<vmem>>, %arg2: memref<9x4x8xf32, #tpu.memory_space<vmem>>, %arg3: memref<1x8xf32, #tpu.memory_space<vmem>>, %arg4: memref<1x8x8x8xf32, #tpu.memory_space<vmem>>) attributes {dimension_semantics = [#tpu.dimension_semantics<parallel>], iteration_bounds = array<i64: 2>, scalar_prefetch = 0 : i64, scratch_operands = 0 : i64, tpu.core_type = #tpu.core_type<tc>, window_params = [{transform_indices = @transform_0, window_bounds = array<i64: 1, 36, 9, 4>}, {pipeline_mode = #tpu.pipeline_mode<synchronous>, transform_indices = @transform_1, window_bounds = array<i64: 9, 4, 8>}, {pipeline_mode = #tpu.pipeline_mode<synchronous>, transform_indices = @transform_2, window_bounds = array<i64: 1, 8>}, {transform_indices = @transform_3, window_bounds = array<i64: 1, 8, 8, 8>}]} {
    %cst = arith.constant 0.000000e+00 : f32
    %0 = vector.broadcast %cst : f32 to vector<64x8xf32>
    %c0 = arith.constant 0 : index
    %c0_0 = arith.constant 0 : index
    %c0_1 = arith.constant 0 : index
    %c0_2 = arith.constant 0 : index
    %1 = vector.load %arg1[%c0, %c0_0, %c0_1, %c0_2] : memref<1x36x9x4xf32, #tpu.memory_space<vmem>>, vector<1x8x8x4xf32>
    %2 = vector.shape_cast %1 : vector<1x8x8x4xf32> to vector<8x8x4xf32>
    %3 = vector.shape_cast %2 : vector<8x8x4xf32> to vector<64x4xf32>
    %c0_3 = arith.constant 0 : index
    %c0_4 = arith.constant 0 : index
    %c0_5 = arith.constant 0 : index
    %4 = vector.load %arg2[%c0_3, %c0_4, %c0_5] : memref<9x4x8xf32, #tpu.memory_space<vmem>>, vector<1x4x8xf32>
    %5 = vector.shape_cast %4 : vector<1x4x8xf32> to vector<4x8xf32>
    %cst_6 = arith.constant dense<0.000000e+00> : vector<64x8xf32>
    %6 = tpu.matmul %3, %5, %cst_6 {dimension_numbers = #tpu.dot_dimension_numbers<[1], [0], [0], [1], [0, 0, 1, 1], [], []>} : vector<64x4xf32>, vector<4x8xf32>, vector<64x8xf32> -> vector<64x8xf32>
    %7 = arith.addf %0, %6 : vector<64x8xf32>
    %c0_7 = arith.constant 0 : index
    %c9 = arith.constant 9 : index
    %c0_8 = arith.constant 0 : index
    %c0_9 = arith.constant 0 : index
    %8 = vector.load %arg1[%c0_7, %c9, %c0_8, %c0_9] : memref<1x36x9x4xf32, #tpu.memory_space<vmem>>, vector<1x8x8x4xf32>
    %9 = vector.shape_cast %8 : vector<1x8x8x4xf32> to vector<8x8x4xf32>
    %10 = vector.shape_cast %9 : vector<8x8x4xf32> to vector<64x4xf32>
    %c1 = arith.constant 1 : index
    %c0_10 = arith.constant 0 : index
    %c0_11 = arith.constant 0 : index
    %11 = vector.load %arg2[%c1, %c0_10, %c0_11] : memref<9x4x8xf32, #tpu.memory_space<vmem>>, vector<1x4x8xf32>
    %12 = vector.shape_cast %11 : vector<1x4x8xf32> to vector<4x8xf32>
    %cst_12 = arith.constant dense<0.000000e+00> : vector<64x8xf32>
    %13 = tpu.matmul %10, %12, %cst_12 {dimension_numbers = #tpu.dot_dimension_numbers<[1], [0], [0], [1], [0, 0, 1, 1], [], []>} : vector<64x4xf32>, vector<4x8xf32>, vector<64x8xf32> -> vector<64x8xf32>
    %14 = arith.addf %7, %13 : vector<64x8xf32>
    %c0_13 = arith.constant 0 : index
    %c0_14 = arith.constant 0 : index
    %c1_15 = arith.constant 1 : index
    %c0_16 = arith.constant 0 : index
    %15 = vector.load %arg1[%c0_13, %c0_14, %c1_15, %c0_16] : memref<1x36x9x4xf32, #tpu.memory_space<vmem>>, vector<1x8x8x4xf32>
    %16 = vector.shape_cast %15 : vector<1x8x8x4xf32> to vector<8x8x4xf32>
    %17 = vector.shape_cast %16 : vector<8x8x4xf32> to vector<64x4xf32>
    %c2 = arith.constant 2 : index
    %c0_17 = arith.constant 0 : index
    %c0_18 = arith.constant 0 : index
    %18 = vector.load %arg2[%c2, %c0_17, %c0_18] : memref<9x4x8xf32, #tpu.memory_space<vmem>>, vector<1x4x8xf32>
    %19 = vector.shape_cast %18 : vector<1x4x8xf32> to vector<4x8xf32>
    %cst_19 = arith.constant dense<0.000000e+00> : vector<64x8xf32>
    %20 = tpu.matmul %17, %19, %cst_19 {dimension_numbers = #tpu.dot_dimension_numbers<[1], [0], [0], [1], [0, 0, 1, 1], [], []>} : vector<64x4xf32>, vector<4x8xf32>, vector<64x8xf32> -> vector<64x8xf32>
    %21 = arith.addf %14, %20 : vector<64x8xf32>
    %c0_20 = arith.constant 0 : index
    %c18 = arith.constant 18 : index
    %c0_21 = arith.constant 0 : index
    %c0_22 = arith.constant 0 : index
    %22 = vector.load %arg1[%c0_20, %c18, %c0_21, %c0_22] : memref<1x36x9x4xf32, #tpu.memory_space<vmem>>, vector<1x8x8x4xf32>
    %23 = vector.shape_cast %22 : vector<1x8x8x4xf32> to vector<8x8x4xf32>
    %24 = vector.shape_cast %23 : vector<8x8x4xf32> to vector<64x4xf32>
    %c3 = arith.constant 3 : index
    %c0_23 = arith.constant 0 : index
    %c0_24 = arith.constant 0 : index
    %25 = vector.load %arg2[%c3, %c0_23, %c0_24] : memref<9x4x8xf32, #tpu.memory_space<vmem>>, vector<1x4x8xf32>
    %26 = vector.shape_cast %25 : vector<1x4x8xf32> to vector<4x8xf32>
    %cst_25 = arith.constant dense<0.000000e+00> : vector<64x8xf32>
    %27 = tpu.matmul %24, %26, %cst_25 {dimension_numbers = #tpu.dot_dimension_numbers<[1], [0], [0], [1], [0, 0, 1, 1], [], []>} : vector<64x4xf32>, vector<4x8xf32>, vector<64x8xf32> -> vector<64x8xf32>
    %28 = arith.addf %21, %27 : vector<64x8xf32>
    %c0_26 = arith.constant 0 : index
    %c27 = arith.constant 27 : index
    %c0_27 = arith.constant 0 : index
    %c0_28 = arith.constant 0 : index
    %29 = vector.load %arg1[%c0_26, %c27, %c0_27, %c0_28] : memref<1x36x9x4xf32, #tpu.memory_space<vmem>>, vector<1x8x8x4xf32>
    %30 = vector.shape_cast %29 : vector<1x8x8x4xf32> to vector<8x8x4xf32>
    %31 = vector.shape_cast %30 : vector<8x8x4xf32> to vector<64x4xf32>
    %c4 = arith.constant 4 : index
    %c0_29 = arith.constant 0 : index
    %c0_30 = arith.constant 0 : index
    %32 = vector.load %arg2[%c4, %c0_29, %c0_30] : memref<9x4x8xf32, #tpu.memory_space<vmem>>, vector<1x4x8xf32>
    %33 = vector.shape_cast %32 : vector<1x4x8xf32> to vector<4x8xf32>
    %cst_31 = arith.constant dense<0.000000e+00> : vector<64x8xf32>
    %34 = tpu.matmul %31, %33, %cst_31 {dimension_numbers = #tpu.dot_dimension_numbers<[1], [0], [0], [1], [0, 0, 1, 1], [], []>} : vector<64x4xf32>, vector<4x8xf32>, vector<64x8xf32> -> vector<64x8xf32>
    %35 = arith.addf %28, %34 : vector<64x8xf32>
    %c0_32 = arith.constant 0 : index
    %c18_33 = arith.constant 18 : index
    %c1_34 = arith.constant 1 : index
    %c0_35 = arith.constant 0 : index
    %36 = vector.load %arg1[%c0_32, %c18_33, %c1_34, %c0_35] : memref<1x36x9x4xf32, #tpu.memory_space<vmem>>, vector<1x8x8x4xf32>
    %37 = vector.shape_cast %36 : vector<1x8x8x4xf32> to vector<8x8x4xf32>
    %38 = vector.shape_cast %37 : vector<8x8x4xf32> to vector<64x4xf32>
    %c5 = arith.constant 5 : index
    %c0_36 = arith.constant 0 : index
    %c0_37 = arith.constant 0 : index
    %39 = vector.load %arg2[%c5, %c0_36, %c0_37] : memref<9x4x8xf32, #tpu.memory_space<vmem>>, vector<1x4x8xf32>
    %40 = vector.shape_cast %39 : vector<1x4x8xf32> to vector<4x8xf32>
    %cst_38 = arith.constant dense<0.000000e+00> : vector<64x8xf32>
    %41 = tpu.matmul %38, %40, %cst_38 {dimension_numbers = #tpu.dot_dimension_numbers<[1], [0], [0], [1], [0, 0, 1, 1], [], []>} : vector<64x4xf32>, vector<4x8xf32>, vector<64x8xf32> -> vector<64x8xf32>
    %42 = arith.addf %35, %41 : vector<64x8xf32>
    %c0_39 = arith.constant 0 : index
    %c1_40 = arith.constant 1 : index
    %c0_41 = arith.constant 0 : index
    %c0_42 = arith.constant 0 : index
    %43 = vector.load %arg1[%c0_39, %c1_40, %c0_41, %c0_42] : memref<1x36x9x4xf32, #tpu.memory_space<vmem>>, vector<1x8x8x4xf32>
    %44 = vector.shape_cast %43 : vector<1x8x8x4xf32> to vector<8x8x4xf32>
    %45 = vector.shape_cast %44 : vector<8x8x4xf32> to vector<64x4xf32>
    %c6 = arith.constant 6 : index
    %c0_43 = arith.constant 0 : index
    %c0_44 = arith.constant 0 : index
    %46 = vector.load %arg2[%c6, %c0_43, %c0_44] : memref<9x4x8xf32, #tpu.memory_space<vmem>>, vector<1x4x8xf32>
    %47 = vector.shape_cast %46 : vector<1x4x8xf32> to vector<4x8xf32>
    %cst_45 = arith.constant dense<0.000000e+00> : vector<64x8xf32>
    %48 = tpu.matmul %45, %47, %cst_45 {dimension_numbers = #tpu.dot_dimension_numbers<[1], [0], [0], [1], [0, 0, 1, 1], [], []>} : vector<64x4xf32>, vector<4x8xf32>, vector<64x8xf32> -> vector<64x8xf32>
    %49 = arith.addf %42, %48 : vector<64x8xf32>
    %c0_46 = arith.constant 0 : index
    %c10 = arith.constant 10 : index
    %c0_47 = arith.constant 0 : index
    %c0_48 = arith.constant 0 : index
    %50 = vector.load %arg1[%c0_46, %c10, %c0_47, %c0_48] : memref<1x36x9x4xf32, #tpu.memory_space<vmem>>, vector<1x8x8x4xf32>
    %51 = vector.shape_cast %50 : vector<1x8x8x4xf32> to vector<8x8x4xf32>
    %52 = vector.shape_cast %51 : vector<8x8x4xf32> to vector<64x4xf32>
    %c7 = arith.constant 7 : index
    %c0_49 = arith.constant 0 : index
    %c0_50 = arith.constant 0 : index
    %53 = vector.load %arg2[%c7, %c0_49, %c0_50] : memref<9x4x8xf32, #tpu.memory_space<vmem>>, vector<1x4x8xf32>
    %54 = vector.shape_cast %53 : vector<1x4x8xf32> to vector<4x8xf32>
    %cst_51 = arith.constant dense<0.000000e+00> : vector<64x8xf32>
    %55 = tpu.matmul %52, %54, %cst_51 {dimension_numbers = #tpu.dot_dimension_numbers<[1], [0], [0], [1], [0, 0, 1, 1], [], []>} : vector<64x4xf32>, vector<4x8xf32>, vector<64x8xf32> -> vector<64x8xf32>
    %56 = arith.addf %49, %55 : vector<64x8xf32>
    %c0_52 = arith.constant 0 : index
    %c1_53 = arith.constant 1 : index
    %c1_54 = arith.constant 1 : index
    %c0_55 = arith.constant 0 : index
    %57 = vector.load %arg1[%c0_52, %c1_53, %c1_54, %c0_55] : memref<1x36x9x4xf32, #tpu.memory_space<vmem>>, vector<1x8x8x4xf32>
    %58 = vector.shape_cast %57 : vector<1x8x8x4xf32> to vector<8x8x4xf32>
    %59 = vector.shape_cast %58 : vector<8x8x4xf32> to vector<64x4xf32>
    %c8 = arith.constant 8 : index
    %c0_56 = arith.constant 0 : index
    %c0_57 = arith.constant 0 : index
    %60 = vector.load %arg2[%c8, %c0_56, %c0_57] : memref<9x4x8xf32, #tpu.memory_space<vmem>>, vector<1x4x8xf32>
    %61 = vector.shape_cast %60 : vector<1x4x8xf32> to vector<4x8xf32>
    %cst_58 = arith.constant dense<0.000000e+00> : vector<64x8xf32>
    %62 = tpu.matmul %59, %61, %cst_58 {dimension_numbers = #tpu.dot_dimension_numbers<[1], [0], [0], [1], [0, 0, 1, 1], [], []>} : vector<64x4xf32>, vector<4x8xf32>, vector<64x8xf32> -> vector<64x8xf32>
    %63 = arith.addf %56, %62 : vector<64x8xf32>
    %c0_59 = arith.constant 0 : index
    %c0_60 = arith.constant 0 : index
    %64 = vector.load %arg3[%c0_59, %c0_60] : memref<1x8xf32, #tpu.memory_space<vmem>>, vector<1x8xf32>
    %65 = vector.broadcast %64 : vector<1x8xf32> to vector<64x8xf32>
    %66 = arith.addf %63, %65 : vector<64x8xf32>
    %cst_61 = arith.constant 0.000000e+00 : f32
    %67 = vector.broadcast %cst_61 : f32 to vector<64x8xf32>
    %68 = arith.maximumf %66, %67 : vector<64x8xf32>
    %69 = vector.shape_cast %68 : vector<64x8xf32> to vector<8x8x8xf32>
    %c0_62 = arith.constant 0 : index
    %c0_63 = arith.constant 0 : index
    %c0_64 = arith.constant 0 : index
    %c0_65 = arith.constant 0 : index
    %70 = vector.load %arg4[%c0_62, %c0_63, %c0_64, %c0_65] : memref<1x8x8x8xf32, #tpu.memory_space<vmem>>, vector<1x8x8x8xf32>
    %71 = vector.shape_cast %70 : vector<1x8x8x8xf32> to vector<8x8x8xf32>
    %72 = vector.shape_cast %69 : vector<8x8x8xf32> to vector<1x8x8x8xf32>
    tpu.vector_store %arg4[%c0_62, %c0_63, %c0_64, %c0_65], %72 {strides = array<i32>} : memref<1x8x8x8xf32, #tpu.memory_space<vmem>>, vector<1x8x8x8xf32>,
    return
  }
  func.func @transform_0(%arg0: i32) -> (i32, i32, i32, i32) {
    %c0_i32 = arith.constant 0 : i32
    %c0_i32_0 = arith.constant 0 : i32
    %c0_i32_1 = arith.constant 0 : i32
    %c0_i32_2 = arith.constant 0 : i32
    return %arg0, %c0_i32, %c0_i32_0, %c0_i32_1 : i32, i32, i32, i32
  }
  func.func @transform_1(%arg0: i32) -> (i32, i32, i32) {
    %c0_i32 = arith.constant 0 : i32
    %c0_i32_0 = arith.constant 0 : i32
    %c0_i32_1 = arith.constant 0 : i32
    %c0_i32_2 = arith.constant 0 : i32
    return %c0_i32, %c0_i32_0, %c0_i32_1 : i32, i32, i32
  }
  func.func @transform_2(%arg0: i32) -> (i32, i32) {
    %c0_i32 = arith.constant 0 : i32
    %c0_i32_0 = arith.constant 0 : i32
    %c0_i32_1 = arith.constant 0 : i32
    return %c0_i32, %c0_i32_0 : i32, i32
  }
  func.func @transform_3(%arg0: i32) -> (i32, i32, i32, i32) {
    %c0_i32 = arith.constant 0 : i32
    %c0_i32_0 = arith.constant 0 : i32
    %c0_i32_1 = arith.constant 0 : i32
    %c0_i32_2 = arith.constant 0 : i32
    return %arg0, %c0_i32, %c0_i32_0, %c0_i32_1 : i32, i32, i32, i32
  }
}

</mosaic_0001>

<llo_original>
// kernel: tpu_custom_call.1
$region0: #{tpu_custom_call.1}
  #allocation0 [shape = 'u32[]', space=smem, size = 0x4, offset = 0x4, fixed_abs, tag = 'smem constant byte address 0x4 - core index']
  #allocation1 [shape = 'u32[144,128]{1,0:T(1,128)}', space=vmem, size = 0x12000, scoped, tag = 'internal scratch']
  %s0 = inlined_call_operand.vmem [shape: f32[2,36,9,4], index: 0, kind: input, shape index: {}]
  %s1 = inlined_call_operand.vmem [shape: f32[9,4,8], index: 1, kind: input, shape index: {}]
  %s2 = inlined_call_operand.vmem [shape: f32[1,8], index: 2, kind: input, shape index: {}]
  %s3 = inlined_call_operand.hbm [shape: f32[2,8,8,8], index: 3, kind: output, shape index: {}]
  %s4 = sld [smem:[#allocation0]]
  $region45: #{tpu_custom_call.1} parent=0
    _
  %s6 = ssub.s32 1, %s4
  %s7 = scalar_select 0, %s6, %s4
  $region1: #{tpu_custom_call.1} parent=0
    #allocation2 [shape = 'u8[65536]{0}', space=vmem, size = 0x10000, scoped, tag = 'output window, operand 0']
    #allocation3 [shape = 's32[2]{0}', space=sflag, size = 0x8, scoped, tag = 'scoped memory for tpu_custom_call.1']
    %8 = vsyncpa [#allocation3], 0
    %s9 = scalar_lea.sflag [#allocation3], 1
    %10 = vsyncpa %s9, 0
    loop: start=0, step=1, limit=4
    $region2: #{tpu_custom_call.1} parent=1 // loop_pre_header
      _
    $region3: #{tpu_custom_call.1} parent=1 // loop_header
      %s12 = sphi 0, %s16
      %p13 = scmp.ge.s32.totalorder %s12, 4
      %s22 = sphi 0, %s24
      %s25 = sphi 0, %s22
      %s26 = sphi 0, %s25
      %s42 = sphi 0, %s26
      %s46 = sphi 0, %s46
      %s48 = sphi 0, %s46
      %s49 = sphi 0, %s48
      %s63 = sphi 0, %s49
      %s67 = sphi 0, %s67
      %s69 = sphi 0, %s67
      %s70 = sphi 0, %s69
      %s84 = sphi 0, %s70
      %s90 = sphi 0, %s92
      %s93 = sphi 0, %s90
      %s94 = sphi 0, %s93
      %s110 = sphi 0, %s94
    $region4: #{tpu_custom_call.1} parent=1 // loop_header_branch
      %15 = sbr.rel (%p13) target = $region8
    $region5: #{tpu_custom_call.1} parent=1 // loop_body
      %s17 = ssub.s32 %s12, 1
      %s18 = ssub.s32 %s12, 2
      %s19 = sadd.s32 %s12, 1
      %s20 = ssub.s32 %s12, %s19
      %p21 = scmp.eq.s32.totalorder %s20, 0
      %s23 = sadd.s32 %s22, 1
      %s24 = scalar_select %p21, %s22, %s23
      %p27 = pneg %p21
      %p28 = scmp.eq.s32.totalorder %s12, 1
      %p29 = por %p27, %p28
      %p30 = scmp.ne.s32.totalorder %s22, %s25
      %p31 = scmp.eq.s32.totalorder %s12, 0
      %p32 = por %p30, %p31
      %p33 = scmp.ne.s32.totalorder %s22, %s25
      %p34 = scmp.eq.s32.totalorder %s17, 1
      %p35 = por %p33, %p34
      %p36 = scmp.ne.s32.totalorder %s25, %s26
      %p37 = scmp.eq.s32.totalorder %s17, 0
      %p38 = por %p36, %p37
      %p39 = scmp.ne.s32.totalorder %s25, %s26
      %p40 = scmp.eq.s32.totalorder %s18, 1
      %p41 = por %p39, %p40
      %p43 = scmp.ne.s32.totalorder %s26, %s42
      %p44 = scmp.eq.s32.totalorder %s18, 0
      %p45 = por %p43, %p44
      %s47 = sadd.s32 %s46, 1
      %p50 = scmp.eq.s32.totalorder %s12, 1
      %p51 = scmp.ne.s32.totalorder %s46, %s48
      %p52 = scmp.eq.s32.totalorder %s12, 0
      %p53 = por %p51, %p52
      %p54 = scmp.ne.s32.totalorder %s46, %s48
      %p55 = scmp.eq.s32.totalorder %s17, 1
      %p56 = por %p54, %p55
      %p57 = scmp.ne.s32.totalorder %s48, %s49
      %p58 = scmp.eq.s32.totalorder %s17, 0
      %p59 = por %p57, %p58
      %p60 = scmp.ne.s32.totalorder %s48, %s49
      %p61 = scmp.eq.s32.totalorder %s18, 1
      %p62 = por %p60, %p61
      %p64 = scmp.ne.s32.totalorder %s49, %s63
      %p65 = scmp.eq.s32.totalorder %s18, 0
      %p66 = por %p64, %p65
      %s68 = sadd.s32 %s67, 1
      %p71 = scmp.eq.s32.totalorder %s12, 1
      %p72 = scmp.ne.s32.totalorder %s67, %s69
      %p73 = scmp.eq.s32.totalorder %s12, 0
      %p74 = por %p72, %p73
      %p75 = scmp.ne.s32.totalorder %s67, %s69
      %p76 = scmp.eq.s32.totalorder %s17, 1
      %p77 = por %p75, %p76
      %p78 = scmp.ne.s32.totalorder %s69, %s70
      %p79 = scmp.eq.s32.totalorder %s17, 0
      %p80 = por %p78, %p79
      %p81 = scmp.ne.s32.totalorder %s69, %s70
      %p82 = scmp.eq.s32.totalorder %s18, 1
      %p83 = por %p81, %p82
      %p85 = scmp.ne.s32.totalorder %s70, %s84
      %p86 = scmp.eq.s32.totalorder %s18, 0
      %p87 = por %p85, %p86
      %s88 = ssub.s32 %s12, %s19
      %p89 = scmp.eq.s32.totalorder %s88, 0
      %s91 = sadd.s32 %s90, 1
      %s92 = scalar_select %p89, %s90, %s91
      %p95 = pneg %p89
      %p96 = scmp.eq.s32.totalorder %s12, 1
      %p97 = por %p95, %p96
      %p98 = scmp.ne.s32.totalorder %s90, %s93
      %p99 = scmp.eq.s32.totalorder %s12, 0
      %p100 = por %p98, %p99
      %p101 = scmp.ne.s32.totalorder %s90, %s93
      %p102 = scmp.eq.s32.totalorder %s17, 1
      %p103 = por %p101, %p102
      %p104 = scmp.ne.s32.totalorder %s93, %s94
      %p105 = scmp.eq.s32.totalorder %s17, 0
      %p106 = por %p104, %p105
      %p107 = scmp.ne.s32.totalorder %s93, %s94
      %p108 = scmp.eq.s32.totalorder %s18, 1
      %p109 = por %p107, %p108
      %p111 = scmp.ne.s32.totalorder %s94, %s110
      %p112 = scmp.eq.s32.totalorder %s18, 0
      %p113 = por %p111, %p112
      %p114 = scmp.le.s32.totalorder 1, %s12
      %p115 = scmp.lt.s32.totalorder %s12, 3
      %p116 = pnand %p114, %p115
      %p117 = pneg %p116
      // Predicated region
      $region9: #{tpu_custom_call.1} parent=5 // pred_check
        _
      $region10: #{tpu_custom_call.1} parent=5 // pred_check_branch
        %119 = sbr.rel (%p116) target = $region12
      $region11: #{tpu_custom_call.1} parent=5 // pred_region
        %s120 = ssub.s32 %s12, 1
        // Predicated region
        $region13: #{tpu_custom_call.1} parent=11 // pred_check
          %p121 = pneg %p59
        $region14: #{tpu_custom_call.1} parent=11 // pred_check_branch
          %123 = sbr.rel (%p121) target = $region16
        $region15: #{tpu_custom_call.1} parent=11 // pred_region
          _
        $region16: #{tpu_custom_call.1} parent=11 // pred_fallthru
          _
        // Predicated region
        $region17: #{tpu_custom_call.1} parent=11 // pred_check
          %p124 = pneg %p80
        $region18: #{tpu_custom_call.1} parent=11 // pred_check_branch
          %126 = sbr.rel (%p124) target = $region20
        $region19: #{tpu_custom_call.1} parent=11 // pred_region
          _
        $region20: #{tpu_custom_call.1} parent=11 // pred_fallthru
          _
      $region12: #{tpu_custom_call.1} parent=5 // pred_fallthru
        _
      %p127 = scmp.lt.s32.totalorder %s12, 2
      // Predicated region
      $region21: #{tpu_custom_call.1} parent=5 // pred_check
        %p128 = pneg %p127
      $region22: #{tpu_custom_call.1} parent=5 // pred_check_branch
        %130 = sbr.rel (%p128) target = $region24
      $region23: #{tpu_custom_call.1} parent=5 // pred_region
        // Predicated region
        $region25: #{tpu_custom_call.1} parent=23 // pred_check
          %p131 = pneg %p32
        $region26: #{tpu_custom_call.1} parent=23 // pred_check_branch
          %133 = sbr.rel (%p131) target = $region28
        $region27: #{tpu_custom_call.1} parent=23 // pred_region
          %p134 = scmp.lt.s32.totalorder %s12, 1
          %s135 = scalar_select %p134, %s12, 1
          %s136 = smul.addr %s135, 72
          %s137 = smul.addr %s136, 8
          %s138 = scalar_lea.vmem %s0, %s137
        $region28: #{tpu_custom_call.1} parent=23 // pred_fallthru
          _
      $region24: #{tpu_custom_call.1} parent=5 // pred_fallthru
        _
      %p139 = scmp.le.s32.totalorder 1, %s12
      %p140 = scmp.lt.s32.totalorder %s12, 3
      %p141 = pnand %p139, %p140
      %p142 = pneg %p141
      // Predicated region
      $region29: #{tpu_custom_call.1} parent=5 // pred_check
        _
      $region30: #{tpu_custom_call.1} parent=5 // pred_check_branch
        %144 = sbr.rel (%p141) target = $region32
      $region31: #{tpu_custom_call.1} parent=5 // pred_region
        %s145 = ssub.s32 %s12, 1
        %p146 = scmp.lt.s32.totalorder %s17, 1
        %s147 = scalar_select %p146, %s17, 1
        %s148 = smul.addr %s147, 72
        %s149 = smul.addr %s148, 8
        %s150 = scalar_lea.vmem %s0, %s149
        %p151 = pneg %p38
        %p152 = pneg %p35
        %p153 = pneg %p59
        %p154 = pneg %p56
        %p155 = pneg %p80
        %p156 = pneg %p77
        %p157 = pneg %p106
        %p158 = pneg %p103
        %s159 = sand.u32 %s93, 1
        %s160 = scalar_lea.sflag [#allocation3], %s159
        %s161 = sand.u32 %s93, 1
        %s162 = smul.addr %s161, 64
        %s163 = scalar_lea.vmem [#allocation2], %s162
        %p164 = scmp.lt.s32.totalorder %s17, 1
        %s165 = scalar_select %p164, %s17, 1
        %s166 = smul.addr %s165, 72
        %s167 = smul.addr %s166, 8
        %s168 = scalar_lea.vmem %s0, %s167
        %v169 = vld [vmem:[%s168] sm:$0xff]
        %v170 = vld [vmem:[%s168 + $0x10] sm:$0xff]
        %v171 = vld [vmem:[%s168 + $0x20] sm:$0xff]
        %v172 = vld [vmem:[%s168 + $0x30] sm:$0xff]
        %v173 = vld [vmem:[%s168 + $0x40] sm:$0xff]
        %v174 = vld [vmem:[%s168 + $0x50] sm:$0xff]
        %v175 = vld [vmem:[%s168 + $0x60] sm:$0xff]
        %v176 = vld [vmem:[%s168 + $0x70] sm:$0xff]
        %v177 = vld [vmem:[%s1] sm:$0xf]
        %s178 = scalar_lea.vmem %s168, 144
        %v179 = vld [vmem:[%s178] sm:$0xff]
        %v180 = vld [vmem:[%s178 + $0x10] sm:$0xff]
        %v181 = vld [vmem:[%s178 + $0x20] sm:$0xff]
        %v182 = vld [vmem:[%s178 + $0x30] sm:$0xff]
        %v183 = vld [vmem:[%s178 + $0x40] sm:$0xff]
        %v184 = vld [vmem:[%s178 + $0x50] sm:$0xff]
        %v185 = vld [vmem:[%s178 + $0x60] sm:$0xff]
        %v186 = vld [vmem:[%s178 + $0x70] sm:$0xff]
        %s187 = scalar_lea.vmem %s1, 4
        %v188 = vld [vmem:[%s187] sm:$0xf]
        %vm189 = vcmask 31744
        %v191 = vsel %vm189, %v179, 0
        %v194 = vsel %vm189, %v180, 0
        %v197 = vsel %vm189, %v181, 0
        %v200 = vsel %vm189, %v182, 0
        %v203 = vsel %vm189, %v183, 0
        %v206 = vsel %vm189, %v184, 0
        %v209 = vsel %vm189, %v185, 0
        %v212 = vsel %vm189, %v186, 0
        %vm214 = vcmask 1043456
        %v216 = vsel %vm214, %v188, 0
        %218 = vmatprep.subr.mxu0 0.0
        %219 = vmatpush1.msra.mxu0 %v216
        %220 = vmatprep.subr.mxu0 0.0
        %221 = vmatpush1.msra.mxu0 0.0
        %222 = vmatprep.subr.mxu0 0.0
        %223 = vmatpush1.msra.mxu0 0.0
        %224 = vmatprep.subr.mxu0 0.0
        %225 = vmatpush1.msra.mxu0 0.0
        %226 = vmatprep.subr.mxu0 0.0
        %227 = vmatpush1.msra.mxu0 0.0
        %228 = vmatprep.subr.mxu0 0.0
        %229 = vmatpush1.msra.mxu0 0.0
        %230 = vmatprep.subr.mxu0 0.0
        %231 = vmatpush1.msra.mxu0 0.0
        %232 = vmatprep.subr.mxu0 0.0
        %233 = vmatpush1.msra.mxu0 0.0
        %234 = vmatprep.subr.mxu0 0.0
        %235 = vmatpush1.msra.mxu0 0.0
        %236 = vmatprep.subr.mxu0 0.0
        %237 = vmatpush1.msra.mxu0 0.0
        %238 = vmatprep.subr.mxu0 0.0
        %239 = vmatpush1.msra.mxu0 0.0
        %240 = vmatprep.subr.mxu0 0.0
        %241 = vmatpush1.msra.mxu0 0.0
        %242 = vmatprep.subr.mxu0 0.0
        %243 = vmatpush1.msra.mxu0 0.0
        %244 = vmatprep.subr.mxu0 0.0
        %245 = vmatpush1.msra.mxu0 0.0
        %246 = vmatprep.subr.mxu0 0.0
        %247 = vmatpush1.msra.mxu0 0.0
        %248 = vmatprep.subr.mxu0 0.0
        %249 = vmatpush1.msra.mxu0 0.0
        %250 = vmatprep.subr.mxu0 0.0
        %251 = vmatpush1.msra.mxu0 0.0
        %252 = vmatprep.subr.mxu0 0.0
        %253 = vmatpush1.msra.mxu0 0.0
        %254 = vmatprep.subr.mxu0 0.0
        %255 = vmatpush1.msra.mxu0 0.0
        %256 = vmatprep.subr.mxu0 0.0
        %257 = vmatpush1.msra.mxu0 0.0
        %258 = vmatprep.subr.mxu0 0.0
        %259 = vmatpush1.msra.mxu0 0.0
        %260 = vmatprep.subr.mxu0 0.0
        %261 = vmatpush1.msra.mxu0 0.0
        %262 = vmatprep.subr.mxu0 0.0
        %263 = vmatpush1.msra.mxu0 0.0
        %264 = vmatprep.subr.mxu0 0.0
        %265 = vmatpush1.msra.mxu0 0.0
        %266 = vmatprep.subr.mxu0 0.0
        %267 = vmatpush1.msra.mxu0 0.0
        %268 = vmatprep.subr.mxu0 0.0
        %269 = vmatpush1.msra.mxu0 0.0
        %270 = vmatprep.subr.mxu0 0.0
        %271 = vmatpush1.msra.mxu0 0.0
        %272 = vmatprep.subr.mxu0 0.0
        %273 = vmatpush1.msra.mxu0 0.0
        %274 = vmatprep.subr.mxu0 0.0
        %275 = vmatpush1.msra.mxu0 0.0
        %276 = vmatprep.subr.mxu0 0.0
        %277 = vmatpush1.msra.mxu0 0.0
        %278 = vmatprep.subr.mxu0 0.0
        %279 = vmatpush1.msra.mxu0 0.0
        %280 = vmatprep.subr.mxu0 0.0
        %281 = vmatpush1.msra.mxu0 0.0
        %282 = vmatprep.mubr.f32.mxu0 0.0
        %283 = vmatmul.mubr.f32.gmra.mrb[0].mxu0 %v191
        %v284 = vpop.f32.mrb[0].mxu0
        %v285 = vadd.f32 0.0, %v284
        %v286 = vpop.f32.mrb[0].mxu0
        %287 = vmatprep.mubr.f32.mxu0 0.0
        %288 = vmatmul.mubr.f32.gmra.mrb[0].mxu0 %v194
        %v289 = vpop.f32.mrb[0].mxu0
        %v290 = vadd.f32 0.0, %v289
        %v291 = vpop.f32.mrb[0].mxu0
        %292 = vmatprep.mubr.f32.mxu0 0.0
        %293 = vmatmul.mubr.f32.gmra.mrb[0].mxu0 %v197
        %v294 = vpop.f32.mrb[0].mxu0
        %v295 = vadd.f32 0.0, %v294
        %v296 = vpop.f32.mrb[0].mxu0
        %297 = vmatprep.mubr.f32.mxu0 0.0
        %298 = vmatmul.mubr.f32.gmra.mrb[0].mxu0 %v200
        %v299 = vpop.f32.mrb[0].mxu0
        %v300 = vadd.f32 0.0, %v299
        %v301 = vpop.f32.mrb[0].mxu0
        %302 = vmatprep.mubr.f32.mxu0 0.0
        %303 = vmatmul.mubr.f32.gmra.mrb[0].mxu0 %v203
        %v304 = vpop.f32.mrb[0].mxu0
        %v305 = vadd.f32 0.0, %v304
        %v306 = vpop.f32.mrb[0].mxu0
        %307 = vmatprep.mubr.f32.mxu0 0.0
        %308 = vmatmul.mubr.f32.gmra.mrb[0].mxu0 %v206
        %v309 = vpop.f32.mrb[0].mxu0
        %v310 = vadd.f32 0.0, %v309
        %v311 = vpop.f32.mrb[0].mxu0
        %312 = vmatprep.mubr.f32.mxu0 0.0
        %313 = vmatmul.mubr.f32.gmra.mrb[0].mxu0 %v209
        %v314 = vpop.f32.mrb[0].mxu0
        %v315 = vadd.f32 0.0, %v314
        %v316 = vpop.f32.mrb[0].mxu0
        %317 = vmatprep.mubr.f32.mxu0 0.0
        %318 = vmatmul.mubr.f32.gmra.mrb[0].mxu0 %v212
        %v319 = vpop.f32.mrb[0].mxu0
        %v320 = vadd.f32 0.0, %v319
        %v321 = vpop.f32.mrb[0].mxu0
        %322 = vdwg.mxu0
        %v324 = vsel %vm189, %v169, 0
        %v327 = vsel %vm189, %v170, 0
        %v330 = vsel %vm189, %v171, 0
        %v333 = vsel %vm189, %v172, 0
        %v336 = vsel %vm189, %v173, 0
        %v339 = vsel %vm189, %v174, 0
        %v342 = vsel %vm189, %v175, 0
        %v345 = vsel %vm189, %v176, 0
        %v348 = vsel %vm214, %v177, 0
        %350 = vmatprep.subr.mxu0 0.0
        %351 = vmatpush1.msra.mxu0 %v348
        %352 = vmatprep.subr.mxu0 0.0
        %353 = vmatpush1.msra.mxu0 0.0
        %354 = vmatprep.subr.mxu0 0.0
        %355 = vmatpush1.msra.mxu0 0.0
        %356 = vmatprep.subr.mxu0 0.0
        %357 = vmatpush1.msra.mxu0 0.0
        %358 = vmatprep.subr.mxu0 0.0
        %359 = vmatpush1.msra.mxu0 0.0
        %360 = vmatprep.subr.mxu0 0.0
        %361 = vmatpush1.msra.mxu0 0.0
        %362 = vmatprep.subr.mxu0 0.0
        %363 = vmatpush1.msra.mxu0 0.0
        %364 = vmatprep.subr.mxu0 0.0
        %365 = vmatpush1.msra.mxu0 0.0
        %366 = vmatprep.subr.mxu0 0.0
        %367 = vmatpush1.msra.mxu0 0.0
        %368 = vmatprep.subr.mxu0 0.0
        %369 = vmatpush1.msra.mxu0 0.0
        %370 = vmatprep.subr.mxu0 0.0
        %371 = vmatpush1.msra.mxu0 0.0
        %372 = vmatprep.subr.mxu0 0.0
        %373 = vmatpush1.msra.mxu0 0.0
        %374 = vmatprep.subr.mxu0 0.0
        %375 = vmatpush1.msra.mxu0 0.0
        %376 = vmatprep.subr.mxu0 0.0
        %377 = vmatpush1.msra.mxu0 0.0
        %378 = vmatprep.subr.mxu0 0.0
        %379 = vmatpush1.msra.mxu0 0.0
        %380 = vmatprep.subr.mxu0 0.0
        %381 = vmatpush1.msra.mxu0 0.0
        %382 = vmatprep.subr.mxu0 0.0
        %383 = vmatpush1.msra.mxu0 0.0
        %384 = vmatprep.subr.mxu0 0.0
        %385 = vmatpush1.msra.mxu0 0.0
        %386 = vmatprep.subr.mxu0 0.0
        %387 = vmatpush1.msra.mxu0 0.0
        %388 = vmatprep.subr.mxu0 0.0
        %389 = vmatpush1.msra.mxu0 0.0
        %390 = vmatprep.subr.mxu0 0.0
        %391 = vmatpush1.msra.mxu0 0.0
        %392 = vmatprep.subr.mxu0 0.0
        %393 = vmatpush1.msra.mxu0 0.0
        %394 = vmatprep.subr.mxu0 0.0
        %395 = vmatpush1.msra.mxu0 0.0
        %396 = vmatprep.subr.mxu0 0.0
        %397 = vmatpush1.msra.mxu0 0.0
        %398 = vmatprep.subr.mxu0 0.0
        %399 = vmatpush1.msra.mxu0 0.0
        %400 = vmatprep.subr.mxu0 0.0
        %401 = vmatpush1.msra.mxu0 0.0
        %402 = vmatprep.subr.mxu0 0.0
        %403 = vmatpush1.msra.mxu0 0.0
        %404 = vmatprep.subr.mxu0 0.0
        %405 = vmatpush1.msra.mxu0 0.0
        %406 = vmatprep.subr.mxu0 0.0
        %407 = vmatpush1.msra.mxu0 0.0
        %408 = vmatprep.subr.mxu0 0.0
        %409 = vmatpush1.msra.mxu0 0.0
        %410 = vmatprep.subr.mxu0 0.0
        %411 = vmatpush1.msra.mxu0 0.0
        %412 = vmatprep.subr.mxu0 0.0
        %413 = vmatpush1.msra.mxu0 0.0
        %414 = vmatprep.mubr.f32.mxu0 0.0
        %415 = vmatmul.mubr.f32.gmra.mrb[0].mxu0 %v324
        %v416 = vpop.f32.mrb[0].mxu0
        %v417 = vadd.f32 %v285, %v416
        %v418 = vpop.f32.mrb[0].mxu0
        %419 = vmatprep.mubr.f32.mxu0 0.0
        %420 = vmatmul.mubr.f32.gmra.mrb[0].mxu0 %v327
        %v421 = vpop.f32.mrb[0].mxu0
        %v422 = vadd.f32 %v290, %v421
        %v423 = vpop.f32.mrb[0].mxu0
        %424 = vmatprep.mubr.f32.mxu0 0.0
        %425 = vmatmul.mubr.f32.gmra.mrb[0].mxu0 %v330
        %v426 = vpop.f32.mrb[0].mxu0
        %v427 = vadd.f32 %v295, %v426
        %v428 = vpop.f32.mrb[0].mxu0
        %429 = vmatprep.mubr.f32.mxu0 0.0
        %430 = vmatmul.mubr.f32.gmra.mrb[0].mxu0 %v333
        %v431 = vpop.f32.mrb[0].mxu0
        %v432 = vadd.f32 %v300, %v431
        %v433 = vpop.f32.mrb[0].mxu0
        %434 = vmatprep.mubr.f32.mxu0 0.0
        %435 = vmatmul.mubr.f32.gmra.mrb[0].mxu0 %v336
        %v436 = vpop.f32.mrb[0].mxu0
        %v437 = vadd.f32 %v305, %v436
        %v438 = vpop.f32.mrb[0].mxu0
        %439 = vmatprep.mubr.f32.mxu0 0.0
        %440 = vmatmul.mubr.f32.gmra.mrb[0].mxu0 %v339
        %v441 = vpop.f32.mrb[0].mxu0
        %v442 = vadd.f32 %v310, %v441
        %v443 = vpop.f32.mrb[0].mxu0
        %444 = vmatprep.mubr.f32.mxu0 0.0
        %445 = vmatmul.mubr.f32.gmra.mrb[0].mxu0 %v342
        %v446 = vpop.f32.mrb[0].mxu0
        %v447 = vadd.f32 %v315, %v446
        %v448 = vpop.f32.mrb[0].mxu0
        %449 = vmatprep.mubr.f32.mxu0 0.0
        %450 = vmatmul.mubr.f32.gmra.mrb[0].mxu0 %v345
        %v451 = vpop.f32.mrb[0].mxu0
        %v452 = vadd.f32 %v320, %v451
        %v453 = vpop.f32.mrb[0].mxu0
        %454 = vdwg.mxu0
        %v455 = vld [vmem:[%s168 + $0x1] sm:$0xff]
        %v456 = vld [vmem:[%s168 + $0x11] sm:$0xff]
        %v457 = vld [vmem:[%s168 + $0x21] sm:$0xff]
        %v458 = vld [vmem:[%s168 + $0x31] sm:$0xff]
        %v459 = vld [vmem:[%s168 + $0x41] sm:$0xff]
        %v460 = vld [vmem:[%s168 + $0x51] sm:$0xff]
        %v461 = vld [vmem:[%s168 + $0x61] sm:$0xff]
        %v462 = vld [vmem:[%s168 + $0x71] sm:$0xff]
        %s463 = scalar_lea.vmem %s1, 8
        %v464 = vld [vmem:[%s463] sm:$0xf]
        %v466 = vsel %vm189, %v455, 0
        %v469 = vsel %vm189, %v456, 0
        %v472 = vsel %vm189, %v457, 0
        %v475 = vsel %vm189, %v458, 0
        %v478 = vsel %vm189, %v459, 0
        %v481 = vsel %vm189, %v460, 0
        %v484 = vsel %vm189, %v461, 0
        %v487 = vsel %vm189, %v462, 0
        %v490 = vsel %vm214, %v464, 0
        %492 = vmatprep.subr.mxu0 0.0
        %493 = vmatpush1.msra.mxu0 %v490
        %494 = vmatprep.subr.mxu0 0.0
        %495 = vmatpush1.msra.mxu0 0.0
        %496 = vmatprep.subr.mxu0 0.0
        %497 = vmatpush1.msra.mxu0 0.0
        %498 = vmatprep.subr.mxu0 0.0
        %499 = vmatpush1.msra.mxu0 0.0
        %500 = vmatprep.subr.mxu0 0.0
        %501 = vmatpush1.msra.mxu0 0.0
        %502 = vmatprep.subr.mxu0 0.0
        %503 = vmatpush1.msra.mxu0 0.0
        %504 = vmatprep.subr.mxu0 0.0
        %505 = vmatpush1.msra.mxu0 0.0
        %506 = vmatprep.subr.mxu0 0.0
        %507 = vmatpush1.msra.mxu0 0.0
        %508 = vmatprep.subr.mxu0 0.0
        %509 = vmatpush1.msra.mxu0 0.0
        %510 = vmatprep.subr.mxu0 0.0
        %511 = vmatpush1.msra.mxu0 0.0
        %512 = vmatprep.subr.mxu0 0.0
        %513 = vmatpush1.msra.mxu0 0.0
        %514 = vmatprep.subr.mxu0 0.0
        %515 = vmatpush1.msra.mxu0 0.0
        %516 = vmatprep.subr.mxu0 0.0
        %517 = vmatpush1.msra.mxu0 0.0
        %518 = vmatprep.subr.mxu0 0.0
        %519 = vmatpush1.msra.mxu0 0.0
        %520 = vmatprep.subr.mxu0 0.0
        %521 = vmatpush1.msra.mxu0 0.0
        %522 = vmatprep.subr.mxu0 0.0
        %523 = vmatpush1.msra.mxu0 0.0
        %524 = vmatprep.subr.mxu0 0.0
        %525 = vmatpush1.msra.mxu0 0.0
        %526 = vmatprep.subr.mxu0 0.0
        %527 = vmatpush1.msra.mxu0 0.0
        %528 = vmatprep.subr.mxu0 0.0
        %529 = vmatpush1.msra.mxu0 0.0
        %530 = vmatprep.subr.mxu0 0.0
        %531 = vmatpush1.msra.mxu0 0.0
        %532 = vmatprep.subr.mxu0 0.0
        %533 = vmatpush1.msra.mxu0 0.0
        %534 = vmatprep.subr.mxu0 0.0
        %535 = vmatpush1.msra.mxu0 0.0
        %536 = vmatprep.subr.mxu0 0.0
        %537 = vmatpush1.msra.mxu0 0.0
        %538 = vmatprep.subr.mxu0 0.0
        %539 = vmatpush1.msra.mxu0 0.0
        %540 = vmatprep.subr.mxu0 0.0
        %541 = vmatpush1.msra.mxu0 0.0
        %542 = vmatprep.subr.mxu0 0.0
        %543 = vmatpush1.msra.mxu0 0.0
        %544 = vmatprep.subr.mxu0 0.0
        %545 = vmatpush1.msra.mxu0 0.0
        %546 = vmatprep.subr.mxu0 0.0
        %547 = vmatpush1.msra.mxu0 0.0
        %548 = vmatprep.subr.mxu0 0.0
        %549 = vmatpush1.msra.mxu0 0.0
        %550 = vmatprep.subr.mxu0 0.0
        %551 = vmatpush1.msra.mxu0 0.0
        %552 = vmatprep.subr.mxu0 0.0
        %553 = vmatpush1.msra.mxu0 0.0
        %554 = vmatprep.subr.mxu0 0.0
        %555 = vmatpush1.msra.mxu0 0.0
        %556 = vmatprep.mubr.f32.mxu0 0.0
        %557 = vmatmul.mubr.f32.gmra.mrb[0].mxu0 %v466
        %v558 = vpop.f32.mrb[0].mxu0
        %v559 = vadd.f32 0.0, %v558
        %v560 = vpop.f32.mrb[0].mxu0
        %561 = vmatprep.mubr.f32.mxu0 0.0
        %562 = vmatmul.mubr.f32.gmra.mrb[0].mxu0 %v469
        %v563 = vpop.f32.mrb[0].mxu0
        %v564 = vadd.f32 0.0, %v563
        %v565 = vpop.f32.mrb[0].mxu0
        %566 = vmatprep.mubr.f32.mxu0 0.0
        %567 = vmatmul.mubr.f32.gmra.mrb[0].mxu0 %v472
        %v568 = vpop.f32.mrb[0].mxu0
        %v569 = vadd.f32 0.0, %v568
        %v570 = vpop.f32.mrb[0].mxu0
        %571 = vmatprep.mubr.f32.mxu0 0.0
        %572 = vmatmul.mubr.f32.gmra.mrb[0].mxu0 %v475
        %v573 = vpop.f32.mrb[0].mxu0
        %v574 = vadd.f32 0.0, %v573
        %v575 = vpop.f32.mrb[0].mxu0
        %576 = vmatprep.mubr.f32.mxu0 0.0
        %577 = vmatmul.mubr.f32.gmra.mrb[0].mxu0 %v478
        %v578 = vpop.f32.mrb[0].mxu0
        %v579 = vadd.f32 0.0, %v578
        %v580 = vpop.f32.mrb[0].mxu0
        %581 = vmatprep.mubr.f32.mxu0 0.0
        %582 = vmatmul.mubr.f32.gmra.mrb[0].mxu0 %v481
        %v583 = vpop.f32.mrb[0].mxu0
        %v584 = vadd.f32 0.0, %v583
        %v585 = vpop.f32.mrb[0].mxu0
        %586 = vmatprep.mubr.f32.mxu0 0.0
        %587 = vmatmul.mubr.f32.gmra.mrb[0].mxu0 %v484
        %v588 = vpop.f32.mrb[0].mxu0
        %v589 = vadd.f32 0.0, %v588
        %v590 = vpop.f32.mrb[0].mxu0
        %591 = vmatprep.mubr.f32.mxu0 0.0
        %592 = vmatmul.mubr.f32.gmra.mrb[0].mxu0 %v487
        %v593 = vpop.f32.mrb[0].mxu0
        %v594 = vadd.f32 0.0, %v593
        %v595 = vpop.f32.mrb[0].mxu0
        %596 = vdwg.mxu0
        %v597 = vadd.f32 %v417, %v559
        %v598 = vadd.f32 %v422, %v564
        %v599 = vadd.f32 %v427, %v569
        %v600 = vadd.f32 %v432, %v574
        %v601 = vadd.f32 %v437, %v579
        %v602 = vadd.f32 %v442, %v584
        %v603 = vadd.f32 %v447, %v589
        %v604 = vadd.f32 %v452, %v594
        %s605 = scalar_lea.vmem %s168, 288
        %v606 = vld [vmem:[%s605] sm:$0xff]
        %v607 = vld [vmem:[%s605 + $0x10] sm:$0xff]
        %v608 = vld [vmem:[%s605 + $0x20] sm:$0xff]
        %v609 = vld [vmem:[%s605 + $0x30] sm:$0xff]
        %v610 = vld [vmem:[%s605 + $0x40] sm:$0xff]
        %v611 = vld [vmem:[%s605 + $0x50] sm:$0xff]
        %v612 = vld [vmem:[%s605 + $0x60] sm:$0xff]
        %v613 = vld [vmem:[%s605 + $0x70] sm:$0xff]
        %s614 = scalar_lea.vmem %s1, 12
        %v615 = vld [vmem:[%s614] sm:$0xf]
        %v617 = vsel %vm189, %v606, 0
        %v620 = vsel %vm189, %v607, 0
        %v623 = vsel %vm189, %v608, 0
        %v626 = vsel %vm189, %v609, 0
        %v629 = vsel %vm189, %v610, 0
        %v632 = vsel %vm189, %v611, 0
        %v635 = vsel %vm189, %v612, 0
        %v638 = vsel %vm189, %v613, 0
        %v641 = vsel %vm214, %v615, 0
        %643 = vmatprep.subr.mxu0 0.0
        %644 = vmatpush1.msra.mxu0 %v641
        %645 = vmatprep.subr.mxu0 0.0
        %646 = vmatpush1.msra.mxu0 0.0
        %647 = vmatprep.subr.mxu0 0.0
        %648 = vmatpush1.msra.mxu0 0.0
        %649 = vmatprep.subr.mxu0 0.0
        %650 = vmatpush1.msra.mxu0 0.0
        %651 = vmatprep.subr.mxu0 0.0
        %652 = vmatpush1.msra.mxu0 0.0
        %653 = vmatprep.subr.mxu0 0.0
        %654 = vmatpush1.msra.mxu0 0.0
        %655 = vmatprep.subr.mxu0 0.0
        %656 = vmatpush1.msra.mxu0 0.0
        %657 = vmatprep.subr.mxu0 0.0
        %658 = vmatpush1.msra.mxu0 0.0
        %659 = vmatprep.subr.mxu0 0.0
        %660 = vmatpush1.msra.mxu0 0.0
        %661 = vmatprep.subr.mxu0 0.0
        %662 = vmatpush1.msra.mxu0 0.0
        %663 = vmatprep.subr.mxu0 0.0
        %664 = vmatpush1.msra.mxu0 0.0
        %665 = vmatprep.subr.mxu0 0.0
        %666 = vmatpush1.msra.mxu0 0.0
        %667 = vmatprep.subr.mxu0 0.0
        %668 = vmatpush1.msra.mxu0 0.0
        %669 = vmatprep.subr.mxu0 0.0
        %670 = vmatpush1.msra.mxu0 0.0
        %671 = vmatprep.subr.mxu0 0.0
        %672 = vmatpush1.msra.mxu0 0.0
        %673 = vmatprep.subr.mxu0 0.0
        %674 = vmatpush1.msra.mxu0 0.0
        %675 = vmatprep.subr.mxu0 0.0
        %676 = vmatpush1.msra.mxu0 0.0
        %677 = vmatprep.subr.mxu0 0.0
        %678 = vmatpush1.msra.mxu0 0.0
        %679 = vmatprep.subr.mxu0 0.0
        %680 = vmatpush1.msra.mxu0 0.0
        %681 = vmatprep.subr.mxu0 0.0
        %682 = vmatpush1.msra.mxu0 0.0
        %683 = vmatprep.subr.mxu0 0.0
        %684 = vmatpush1.msra.mxu0 0.0
        %685 = vmatprep.subr.mxu0 0.0
        %686 = vmatpush1.msra.mxu0 0.0
        %687 = vmatprep.subr.mxu0 0.0
        %688 = vmatpush1.msra.mxu0 0.0
        %689 = vmatprep.subr.mxu0 0.0
        %690 = vmatpush1.msra.mxu0 0.0
        %691 = vmatprep.subr.mxu0 0.0
        %692 = vmatpush1.msra.mxu0 0.0
        %693 = vmatprep.subr.mxu0 0.0
        %694 = vmatpush1.msra.mxu0 0.0
        %695 = vmatprep.subr.mxu0 0.0
        %696 = vmatpush1.msra.mxu0 0.0
        %697 = vmatprep.subr.mxu0 0.0
        %698 = vmatpush1.msra.mxu0 0.0
        %699 = vmatprep.subr.mxu0 0.0
        %700 = vmatpush1.msra.mxu0 0.0
        %701 = vmatprep.subr.mxu0 0.0
        %702 = vmatpush1.msra.mxu0 0.0
        %703 = vmatprep.subr.mxu0 0.0
        %704 = vmatpush1.msra.mxu0 0.0
        %705 = vmatprep.subr.mxu0 0.0
        %706 = vmatpush1.msra.mxu0 0.0
        %707 = vmatprep.mubr.f32.mxu0 0.0
        %708 = vmatmul.mubr.f32.gmra.mrb[0].mxu0 %v617
        %v709 = vpop.f32.mrb[0].mxu0
        %v710 = vadd.f32 0.0, %v709
        %v711 = vpop.f32.mrb[0].mxu0
        %712 = vmatprep.mubr.f32.mxu0 0.0
        %713 = vmatmul.mubr.f32.gmra.mrb[0].mxu0 %v620
        %v714 = vpop.f32.mrb[0].mxu0
        %v715 = vadd.f32 0.0, %v714
        %v716 = vpop.f32.mrb[0].mxu0
        %717 = vmatprep.mubr.f32.mxu0 0.0
        %718 = vmatmul.mubr.f32.gmra.mrb[0].mxu0 %v623
        %v719 = vpop.f32.mrb[0].mxu0
        %v720 = vadd.f32 0.0, %v719
        %v721 = vpop.f32.mrb[0].mxu0
        %722 = vmatprep.mubr.f32.mxu0 0.0
        %723 = vmatmul.mubr.f32.gmra.mrb[0].mxu0 %v626
        %v724 = vpop.f32.mrb[0].mxu0
        %v725 = vadd.f32 0.0, %v724
        %v726 = vpop.f32.mrb[0].mxu0
        %727 = vmatprep.mubr.f32.mxu0 0.0
        %728 = vmatmul.mubr.f32.gmra.mrb[0].mxu0 %v629
        %v729 = vpop.f32.mrb[0].mxu0
        %v730 = vadd.f32 0.0, %v729
        %v731 = vpop.f32.mrb[0].mxu0
        %732 = vmatprep.mubr.f32.mxu0 0.0
        %733 = vmatmul.mubr.f32.gmra.mrb[0].mxu0 %v632
        %v734 = vpop.f32.mrb[0].mxu0
        %v735 = vadd.f32 0.0, %v734
        %v736 = vpop.f32.mrb[0].mxu0
        %737 = vmatprep.mubr.f32.mxu0 0.0
        %738 = vmatmul.mubr.f32.gmra.mrb[0].mxu0 %v635
        %v739 = vpop.f32.mrb[0].mxu0
        %v740 = vadd.f32 0.0, %v739
        %v741 = vpop.f32.mrb[0].mxu0
        %742 = vmatprep.mubr.f32.mxu0 0.0
        %743 = vmatmul.mubr.f32.gmra.mrb[0].mxu0 %v638
        %v744 = vpop.f32.mrb[0].mxu0
        %v745 = vadd.f32 0.0, %v744
        %v746 = vpop.f32.mrb[0].mxu0
        %747 = vdwg.mxu0
        %v748 = vadd.f32 %v597, %v710
        %v749 = vadd.f32 %v598, %v715
        %v750 = vadd.f32 %v599, %v720
        %v751 = vadd.f32 %v600, %v725
        %v752 = vadd.f32 %v601, %v730
        %v753 = vadd.f32 %v602, %v735
        %v754 = vadd.f32 %v603, %v740
        %v755 = vadd.f32 %v604, %v745
        %s756 = scalar_lea.vmem %s168, 432
        %v757 = vld [vmem:[%s756] sm:$0xff]
        %v758 = vld [vmem:[%s756 + $0x10] sm:$0xff]
        %v759 = vld [vmem:[%s756 + $0x20] sm:$0xff]
        %v760 = vld [vmem:[%s756 + $0x30] sm:$0xff]
        %v761 = vld [vmem:[%s756 + $0x40] sm:$0xff]
        %v762 = vld [vmem:[%s756 + $0x50] sm:$0xff]
        %v763 = vld [vmem:[%s756 + $0x60] sm:$0xff]
        %v764 = vld [vmem:[%s756 + $0x70] sm:$0xff]
        %s765 = scalar_lea.vmem %s1, 16
        %v766 = vld [vmem:[%s765] sm:$0xf]
        %v768 = vsel %vm189, %v757, 0
        %v771 = vsel %vm189, %v758, 0
        %v774 = vsel %vm189, %v759, 0
        %v777 = vsel %vm189, %v760, 0
        %v780 = vsel %vm189, %v761, 0
        %v783 = vsel %vm189, %v762, 0
        %v786 = vsel %vm189, %v763, 0
        %v789 = vsel %vm189, %v764, 0
        %v792 = vsel %vm214, %v766, 0
        %794 = vmatprep.subr.mxu0 0.0
        %795 = vmatpush1.msra.mxu0 %v792
        %796 = vmatprep.subr.mxu0 0.0
        %797 = vmatpush1.msra.mxu0 0.0
        %798 = vmatprep.subr.mxu0 0.0
        %799 = vmatpush1.msra.mxu0 0.0
        %800 = vmatprep.subr.mxu0 0.0
        %801 = vmatpush1.msra.mxu0 0.0
        %802 = vmatprep.subr.mxu0 0.0
        %803 = vmatpush1.msra.mxu0 0.0
        %804 = vmatprep.subr.mxu0 0.0
        %805 = vmatpush1.msra.mxu0 0.0
        %806 = vmatprep.subr.mxu0 0.0
        %807 = vmatpush1.msra.mxu0 0.0
        %808 = vmatprep.subr.mxu0 0.0
        %809 = vmatpush1.msra.mxu0 0.0
        %810 = vmatprep.subr.mxu0 0.0
        %811 = vmatpush1.msra.mxu0 0.0
        %812 = vmatprep.subr.mxu0 0.0
        %813 = vmatpush1.msra.mxu0 0.0
        %814 = vmatprep.subr.mxu0 0.0
        %815 = vmatpush1.msra.mxu0 0.0
        %816 = vmatprep.subr.mxu0 0.0
        %817 = vmatpush1.msra.mxu0 0.0
        %818 = vmatprep.subr.mxu0 0.0
        %819 = vmatpush1.msra.mxu0 0.0
        %820 = vmatprep.subr.mxu0 0.0
        %821 = vmatpush1.msra.mxu0 0.0
        %822 = vmatprep.subr.mxu0 0.0
        %823 = vmatpush1.msra.mxu0 0.0
        %824 = vmatprep.subr.mxu0 0.0
        %825 = vmatpush1.msra.mxu0 0.0
        %826 = vmatprep.subr.mxu0 0.0
        %827 = vmatpush1.msra.mxu0 0.0
        %828 = vmatprep.subr.mxu0 0.0
        %829 = vmatpush1.msra.mxu0 0.0
        %830 = vmatprep.subr.mxu0 0.0
        %831 = vmatpush1.msra.mxu0 0.0
        %832 = vmatprep.subr.mxu0 0.0
        %833 = vmatpush1.msra.mxu0 0.0
        %834 = vmatprep.subr.mxu0 0.0
        %835 = vmatpush1.msra.mxu0 0.0
        %836 = vmatprep.subr.mxu0 0.0
        %837 = vmatpush1.msra.mxu0 0.0
        %838 = vmatprep.subr.mxu0 0.0
        %839 = vmatpush1.msra.mxu0 0.0
        %840 = vmatprep.subr.mxu0 0.0
        %841 = vmatpush1.msra.mxu0 0.0
        %842 = vmatprep.subr.mxu0 0.0
        %843 = vmatpush1.msra.mxu0 0.0
        %844 = vmatprep.subr.mxu0 0.0
        %845 = vmatpush1.msra.mxu0 0.0
        %846 = vmatprep.subr.mxu0 0.0
        %847 = vmatpush1.msra.mxu0 0.0
        %848 = vmatprep.subr.mxu0 0.0
        %849 = vmatpush1.msra.mxu0 0.0
        %850 = vmatprep.subr.mxu0 0.0
        %851 = vmatpush1.msra.mxu0 0.0
        %852 = vmatprep.subr.mxu0 0.0
        %853 = vmatpush1.msra.mxu0 0.0
        %854 = vmatprep.subr.mxu0 0.0
        %855 = vmatpush1.msra.mxu0 0.0
        %856 = vmatprep.subr.mxu0 0.0
        %857 = vmatpush1.msra.mxu0 0.0
        %858 = vmatprep.mubr.f32.mxu0 0.0
        %859 = vmatmul.mubr.f32.gmra.mrb[0].mxu0 %v768
        %v860 = vpop.f32.mrb[0].mxu0
        %v861 = vadd.f32 0.0, %v860
        %v862 = vpop.f32.mrb[0].mxu0
        %863 = vmatprep.mubr.f32.mxu0 0.0
        %864 = vmatmul.mubr.f32.gmra.mrb[0].mxu0 %v771
        %v865 = vpop.f32.mrb[0].mxu0
        %v866 = vadd.f32 0.0, %v865
        %v867 = vpop.f32.mrb[0].mxu0
        %868 = vmatprep.mubr.f32.mxu0 0.0
        %869 = vmatmul.mubr.f32.gmra.mrb[0].mxu0 %v774
        %v870 = vpop.f32.mrb[0].mxu0
        %v871 = vadd.f32 0.0, %v870
        %v872 = vpop.f32.mrb[0].mxu0
        %873 = vmatprep.mubr.f32.mxu0 0.0
        %874 = vmatmul.mubr.f32.gmra.mrb[0].mxu0 %v777
        %v875 = vpop.f32.mrb[0].mxu0
        %v876 = vadd.f32 0.0, %v875
        %v877 = vpop.f32.mrb[0].mxu0
        %878 = vmatprep.mubr.f32.mxu0 0.0
        %879 = vmatmul.mubr.f32.gmra.mrb[0].mxu0 %v780
        %v880 = vpop.f32.mrb[0].mxu0
        %v881 = vadd.f32 0.0, %v880
        %v882 = vpop.f32.mrb[0].mxu0
        %883 = vmatprep.mubr.f32.mxu0 0.0
        %884 = vmatmul.mubr.f32.gmra.mrb[0].mxu0 %v783
        %v885 = vpop.f32.mrb[0].mxu0
        %v886 = vadd.f32 0.0, %v885
        %v887 = vpop.f32.mrb[0].mxu0
        %888 = vmatprep.mubr.f32.mxu0 0.0
        %889 = vmatmul.mubr.f32.gmra.mrb[0].mxu0 %v786
        %v890 = vpop.f32.mrb[0].mxu0
        %v891 = vadd.f32 0.0, %v890
        %v892 = vpop.f32.mrb[0].mxu0
        %893 = vmatprep.mubr.f32.mxu0 0.0
        %894 = vmatmul.mubr.f32.gmra.mrb[0].mxu0 %v789
        %v895 = vpop.f32.mrb[0].mxu0
        %v896 = vadd.f32 0.0, %v895
        %v897 = vpop.f32.mrb[0].mxu0
        %898 = vdwg.mxu0
        %v899 = vadd.f32 %v748, %v861
        %v900 = vadd.f32 %v749, %v866
        %v901 = vadd.f32 %v750, %v871
        %v902 = vadd.f32 %v751, %v876
        %v903 = vadd.f32 %v752, %v881
        %v904 = vadd.f32 %v753, %v886
        %v905 = vadd.f32 %v754, %v891
        %v906 = vadd.f32 %v755, %v896
        %v907 = vld [vmem:[%s605 + $0x1] sm:$0xff]
        %v908 = vld [vmem:[%s605 + $0x11] sm:$0xff]
        %v909 = vld [vmem:[%s605 + $0x21] sm:$0xff]
        %v910 = vld [vmem:[%s605 + $0x31] sm:$0xff]
        %v911 = vld [vmem:[%s605 + $0x41] sm:$0xff]
        %v912 = vld [vmem:[%s605 + $0x51] sm:$0xff]
        %v913 = vld [vmem:[%s605 + $0x61] sm:$0xff]
        %v914 = vld [vmem:[%s605 + $0x71] sm:$0xff]
        %s915 = scalar_lea.vmem %s1, 20
        %v916 = vld [vmem:[%s915] sm:$0xf]
        %v918 = vsel %vm189, %v907, 0
        %v921 = vsel %vm189, %v908, 0
        %v924 = vsel %vm189, %v909, 0
        %v927 = vsel %vm189, %v910, 0
        %v930 = vsel %vm189, %v911, 0
        %v933 = vsel %vm189, %v912, 0
        %v936 = vsel %vm189, %v913, 0
        %v939 = vsel %vm189, %v914, 0
        %v942 = vsel %vm214, %v916, 0
        %944 = vmatprep.subr.mxu0 0.0
        %945 = vmatpush1.msra.mxu0 %v942
        %946 = vmatprep.subr.mxu0 0.0
        %947 = vmatpush1.msra.mxu0 0.0
        %948 = vmatprep.subr.mxu0 0.0
        %949 = vmatpush1.msra.mxu0 0.0
        %950 = vmatprep.subr.mxu0 0.0
        %951 = vmatpush1.msra.mxu0 0.0
        %952 = vmatprep.subr.mxu0 0.0
        %953 = vmatpush1.msra.mxu0 0.0
        %954 = vmatprep.subr.mxu0 0.0
        %955 = vmatpush1.msra.mxu0 0.0
        %956 = vmatprep.subr.mxu0 0.0
        %957 = vmatpush1.msra.mxu0 0.0
        %958 = vmatprep.subr.mxu0 0.0
        %959 = vmatpush1.msra.mxu0 0.0
        %960 = vmatprep.subr.mxu0 0.0
        %961 = vmatpush1.msra.mxu0 0.0
        %962 = vmatprep.subr.mxu0 0.0
        %963 = vmatpush1.msra.mxu0 0.0
        %964 = vmatprep.subr.mxu0 0.0
        %965 = vmatpush1.msra.mxu0 0.0
        %966 = vmatprep.subr.mxu0 0.0
        %967 = vmatpush1.msra.mxu0 0.0
        %968 = vmatprep.subr.mxu0 0.0
        %969 = vmatpush1.msra.mxu0 0.0
        %970 = vmatprep.subr.mxu0 0.0
        %971 = vmatpush1.msra.mxu0 0.0
        %972 = vmatprep.subr.mxu0 0.0
        %973 = vmatpush1.msra.mxu0 0.0
        %974 = vmatprep.subr.mxu0 0.0
        %975 = vmatpush1.msra.mxu0 0.0
        %976 = vmatprep.subr.mxu0 0.0
        %977 = vmatpush1.msra.mxu0 0.0
        %978 = vmatprep.subr.mxu0 0.0
        %979 = vmatpush1.msra.mxu0 0.0
        %980 = vmatprep.subr.mxu0 0.0
        %981 = vmatpush1.msra.mxu0 0.0
        %982 = vmatprep.subr.mxu0 0.0
        %983 = vmatpush1.msra.mxu0 0.0
        %984 = vmatprep.subr.mxu0 0.0
        %985 = vmatpush1.msra.mxu0 0.0
        %986 = vmatprep.subr.mxu0 0.0
        %987 = vmatpush1.msra.mxu0 0.0
        %988 = vmatprep.subr.mxu0 0.0
        %989 = vmatpush1.msra.mxu0 0.0
        %990 = vmatprep.subr.mxu0 0.0
        %991 = vmatpush1.msra.mxu0 0.0
        %992 = vmatprep.subr.mxu0 0.0
        %993 = vmatpush1.msra.mxu0 0.0
        %994 = vmatprep.subr.mxu0 0.0
        %995 = vmatpush1.msra.mxu0 0.0
        %996 = vmatprep.subr.mxu0 0.0
        %997 = vmatpush1.msra.mxu0 0.0
        %998 = vmatprep.subr.mxu0 0.0
        %999 = vmatpush1.msra.mxu0 0.0
        %1000 = vmatprep.subr.mxu0 0.0
        %1001 = vmatpush1.msra.mxu0 0.0
        %1002 = vmatprep.subr.mxu0 0.0
        %1003 = vmatpush1.msra.mxu0 0.0
        %1004 = vmatprep.subr.mxu0 0.0
        %1005 = vmatpush1.msra.mxu0 0.0
        %1006 = vmatprep.subr.mxu0 0.0
        %1007 = vmatpush1.msra.mxu0 0.0
        %1008 = vmatprep.mubr.f32.mxu0 0.0
        %1009 = vmatmul.mubr.f32.gmra.mrb[0].mxu0 %v918
        %v1010 = vpop.f32.mrb[0].mxu0
        %v1011 = vadd.f32 0.0, %v1010
        %v1012 = vpop.f32.mrb[0].mxu0
        %1013 = vmatprep.mubr.f32.mxu0 0.0
        %1014 = vmatmul.mubr.f32.gmra.mrb[0].mxu0 %v921
        %v1015 = vpop.f32.mrb[0].mxu0
        %v1016 = vadd.f32 0.0, %v1015
        %v1017 = vpop.f32.mrb[0].mxu0
        %1018 = vmatprep.mubr.f32.mxu0 0.0
        %1019 = vmatmul.mubr.f32.gmra.mrb[0].mxu0 %v924
        %v1020 = vpop.f32.mrb[0].mxu0
        %v1021 = vadd.f32 0.0, %v1020
        %v1022 = vpop.f32.mrb[0].mxu0
        %1023 = vmatprep.mubr.f32.mxu0 0.0
        %1024 = vmatmul.mubr.f32.gmra.mrb[0].mxu0 %v927
        %v1025 = vpop.f32.mrb[0].mxu0
        %v1026 = vadd.f32 0.0, %v1025
        %v1027 = vpop.f32.mrb[0].mxu0
        %1028 = vmatprep.mubr.f32.mxu0 0.0
        %1029 = vmatmul.mubr.f32.gmra.mrb[0].mxu0 %v930
        %v1030 = vpop.f32.mrb[0].mxu0
        %v1031 = vadd.f32 0.0, %v1030
        %v1032 = vpop.f32.mrb[0].mxu0
        %1033 = vmatprep.mubr.f32.mxu0 0.0
        %1034 = vmatmul.mubr.f32.gmra.mrb[0].mxu0 %v933
        %v1035 = vpop.f32.mrb[0].mxu0
        %v1036 = vadd.f32 0.0, %v1035
        %v1037 = vpop.f32.mrb[0].mxu0
        %1038 = vmatprep.mubr.f32.mxu0 0.0
        %1039 = vmatmul.mubr.f32.gmra.mrb[0].mxu0 %v936
        %v1040 = vpop.f32.mrb[0].mxu0
        %v1041 = vadd.f32 0.0, %v1040
        %v1042 = vpop.f32.mrb[0].mxu0
        %1043 = vmatprep.mubr.f32.mxu0 0.0
        %1044 = vmatmul.mubr.f32.gmra.mrb[0].mxu0 %v939
        %v1045 = vpop.f32.mrb[0].mxu0
        %v1046 = vadd.f32 0.0, %v1045
        %v1047 = vpop.f32.mrb[0].mxu0
        %1048 = vdwg.mxu0
        %v1049 = vadd.f32 %v899, %v1011
        %v1050 = vadd.f32 %v900, %v1016
        %v1051 = vadd.f32 %v901, %v1021
        %v1052 = vadd.f32 %v902, %v1026
        %v1053 = vadd.f32 %v903, %v1031
        %v1054 = vadd.f32 %v904, %v1036
        %v1055 = vadd.f32 %v905, %v1041
        %v1056 = vadd.f32 %v906, %v1046
        %s1057 = scalar_lea.vmem %s168, 16
        %v1058 = vld [vmem:[%s1057] sm:$0xff]
        %v1059 = vld [vmem:[%s1057 + $0x10] sm:$0xff]
        %v1060 = vld [vmem:[%s1057 + $0x20] sm:$0xff]
        %v1061 = vld [vmem:[%s1057 + $0x30] sm:$0xff]
        %v1062 = vld [vmem:[%s1057 + $0x40] sm:$0xff]
        %v1063 = vld [vmem:[%s1057 + $0x50] sm:$0xff]
        %v1064 = vld [vmem:[%s1057 + $0x60] sm:$0xff]
        %v1065 = vld [vmem:[%s1057 + $0x70] sm:$0xff]
        %s1066 = scalar_lea.vmem %s1, 24
        %v1067 = vld [vmem:[%s1066] sm:$0xf]
        %v1069 = vsel %vm189, %v1058, 0
        %v1072 = vsel %vm189, %v1059, 0
        %v1075 = vsel %vm189, %v1060, 0
        %v1078 = vsel %vm189, %v1061, 0
        %v1081 = vsel %vm189, %v1062, 0
        %v1084 = vsel %vm189, %v1063, 0
        %v1087 = vsel %vm189, %v1064, 0
        %v1090 = vsel %vm189, %v1065, 0
        %v1093 = vsel %vm214, %v1067, 0
        %1095 = vmatprep.subr.mxu0 0.0
        %1096 = vmatpush1.msra.mxu0 %v1093
        %1097 = vmatprep.subr.mxu0 0.0
        %1098 = vmatpush1.msra.mxu0 0.0
        %1099 = vmatprep.subr.mxu0 0.0
        %1100 = vmatpush1.msra.mxu0 0.0
        %1101 = vmatprep.subr.mxu0 0.0
        %1102 = vmatpush1.msra.mxu0 0.0
        %1103 = vmatprep.subr.mxu0 0.0
        %1104 = vmatpush1.msra.mxu0 0.0
        %1105 = vmatprep.subr.mxu0 0.0
        %1106 = vmatpush1.msra.mxu0 0.0
        %1107 = vmatprep.subr.mxu0 0.0
        %1108 = vmatpush1.msra.mxu0 0.0
        %1109 = vmatprep.subr.mxu0 0.0
        %1110 = vmatpush1.msra.mxu0 0.0
        %1111 = vmatprep.subr.mxu0 0.0
        %1112 = vmatpush1.msra.mxu0 0.0
        %1113 = vmatprep.subr.mxu0 0.0
        %1114 = vmatpush1.msra.mxu0 0.0
        %1115 = vmatprep.subr.mxu0 0.0
        %1116 = vmatpush1.msra.mxu0 0.0
        %1117 = vmatprep.subr.mxu0 0.0
        %1118 = vmatpush1.msra.mxu0 0.0
        %1119 = vmatprep.subr.mxu0 0.0
        %1120 = vmatpush1.msra.mxu0 0.0
        %1121 = vmatprep.subr.mxu0 0.0
        %1122 = vmatpush1.msra.mxu0 0.0
        %1123 = vmatprep.subr.mxu0 0.0
        %1124 = vmatpush1.msra.mxu0 0.0
        %1125 = vmatprep.subr.mxu0 0.0
        %1126 = vmatpush1.msra.mxu0 0.0
        %1127 = vmatprep.subr.mxu0 0.0
        %1128 = vmatpush1.msra.mxu0 0.0
        %1129 = vmatprep.subr.mxu0 0.0
        %1130 = vmatpush1.msra.mxu0 0.0
        %1131 = vmatprep.subr.mxu0 0.0
        %1132 = vmatpush1.msra.mxu0 0.0
        %1133 = vmatprep.subr.mxu0 0.0
        %1134 = vmatpush1.msra.mxu0 0.0
        %1135 = vmatprep.subr.mxu0 0.0
        %1136 = vmatpush1.msra.mxu0 0.0
        %1137 = vmatprep.subr.mxu0 0.0
        %1138 = vmatpush1.msra.mxu0 0.0
        %1139 = vmatprep.subr.mxu0 0.0
        %1140 = vmatpush1.msra.mxu0 0.0
        %1141 = vmatprep.subr.mxu0 0.0
        %1142 = vmatpush1.msra.mxu0 0.0
        %1143 = vmatprep.subr.mxu0 0.0
        %1144 = vmatpush1.msra.mxu0 0.0
        %1145 = vmatprep.subr.mxu0 0.0
        %1146 = vmatpush1.msra.mxu0 0.0
        %1147 = vmatprep.subr.mxu0 0.0
        %1148 = vmatpush1.msra.mxu0 0.0
        %1149 = vmatprep.subr.mxu0 0.0
        %1150 = vmatpush1.msra.mxu0 0.0
        %1151 = vmatprep.subr.mxu0 0.0
        %1152 = vmatpush1.msra.mxu0 0.0
        %1153 = vmatprep.subr.mxu0 0.0
        %1154 = vmatpush1.msra.mxu0 0.0
        %1155 = vmatprep.subr.mxu0 0.0
        %1156 = vmatpush1.msra.mxu0 0.0
        %1157 = vmatprep.subr.mxu0 0.0
        %1158 = vmatpush1.msra.mxu0 0.0
        %1159 = vmatprep.mubr.f32.mxu0 0.0
        %1160 = vmatmul.mubr.f32.gmra.mrb[0].mxu0 %v1069
        %v1161 = vpop.f32.mrb[0].mxu0
        %v1162 = vadd.f32 0.0, %v1161
        %v1163 = vpop.f32.mrb[0].mxu0
        %1164 = vmatprep.mubr.f32.mxu0 0.0
        %1165 = vmatmul.mubr.f32.gmra.mrb[0].mxu0 %v1072
        %v1166 = vpop.f32.mrb[0].mxu0
        %v1167 = vadd.f32 0.0, %v1166
        %v1168 = vpop.f32.mrb[0].mxu0
        %1169 = vmatprep.mubr.f32.mxu0 0.0
        %1170 = vmatmul.mubr.f32.gmra.mrb[0].mxu0 %v1075
        %v1171 = vpop.f32.mrb[0].mxu0
        %v1172 = vadd.f32 0.0, %v1171
        %v1173 = vpop.f32.mrb[0].mxu0
        %1174 = vmatprep.mubr.f32.mxu0 0.0
        %1175 = vmatmul.mubr.f32.gmra.mrb[0].mxu0 %v1078
        %v1176 = vpop.f32.mrb[0].mxu0
        %v1177 = vadd.f32 0.0, %v1176
        %v1178 = vpop.f32.mrb[0].mxu0
        %1179 = vmatprep.mubr.f32.mxu0 0.0
        %1180 = vmatmul.mubr.f32.gmra.mrb[0].mxu0 %v1081
        %v1181 = vpop.f32.mrb[0].mxu0
        %v1182 = vadd.f32 0.0, %v1181
        %v1183 = vpop.f32.mrb[0].mxu0
        %1184 = vmatprep.mubr.f32.mxu0 0.0
        %1185 = vmatmul.mubr.f32.gmra.mrb[0].mxu0 %v1084
        %v1186 = vpop.f32.mrb[0].mxu0
        %v1187 = vadd.f32 0.0, %v1186
        %v1188 = vpop.f32.mrb[0].mxu0
        %1189 = vmatprep.mubr.f32.mxu0 0.0
        %1190 = vmatmul.mubr.f32.gmra.mrb[0].mxu0 %v1087
        %v1191 = vpop.f32.mrb[0].mxu0
        %v1192 = vadd.f32 0.0, %v1191
        %v1193 = vpop.f32.mrb[0].mxu0
        %1194 = vmatprep.mubr.f32.mxu0 0.0
        %1195 = vmatmul.mubr.f32.gmra.mrb[0].mxu0 %v1090
        %v1196 = vpop.f32.mrb[0].mxu0
        %v1197 = vadd.f32 0.0, %v1196
        %v1198 = vpop.f32.mrb[0].mxu0
        %1199 = vdwg.mxu0
        %v1200 = vadd.f32 %v1049, %v1162
        %v1201 = vadd.f32 %v1050, %v1167
        %v1202 = vadd.f32 %v1051, %v1172
        %v1203 = vadd.f32 %v1052, %v1177
        %v1204 = vadd.f32 %v1053, %v1182
        %v1205 = vadd.f32 %v1054, %v1187
        %v1206 = vadd.f32 %v1055, %v1192
        %v1207 = vadd.f32 %v1056, %v1197
        %s1208 = scalar_lea.vmem %s168, 160
        %v1209 = vld [vmem:[%s1208] sm:$0xff]
        %v1210 = vld [vmem:[%s1208 + $0x10] sm:$0xff]
        %v1211 = vld [vmem:[%s1208 + $0x20] sm:$0xff]
        %v1212 = vld [vmem:[%s1208 + $0x30] sm:$0xff]
        %v1213 = vld [vmem:[%s1208 + $0x40] sm:$0xff]
        %v1214 = vld [vmem:[%s1208 + $0x50] sm:$0xff]
        %v1215 = vld [vmem:[%s1208 + $0x60] sm:$0xff]
        %v1216 = vld [vmem:[%s1208 + $0x70] sm:$0xff]
        %s1217 = scalar_lea.vmem %s1, 28
        %v1218 = vld [vmem:[%s1217] sm:$0xf]
        %v1220 = vsel %vm189, %v1209, 0
        %v1223 = vsel %vm189, %v1210, 0
        %v1226 = vsel %vm189, %v1211, 0
        %v1229 = vsel %vm189, %v1212, 0
        %v1232 = vsel %vm189, %v1213, 0
        %v1235 = vsel %vm189, %v1214, 0
        %v1238 = vsel %vm189, %v1215, 0
        %v1241 = vsel %vm189, %v1216, 0
        %v1244 = vsel %vm214, %v1218, 0
        %1246 = vmatprep.subr.mxu0 0.0
        %1247 = vmatpush1.msra.mxu0 %v1244
        %1248 = vmatprep.subr.mxu0 0.0
        %1249 = vmatpush1.msra.mxu0 0.0
        %1250 = vmatprep.subr.mxu0 0.0
        %1251 = vmatpush1.msra.mxu0 0.0
        %1252 = vmatprep.subr.mxu0 0.0
        %1253 = vmatpush1.msra.mxu0 0.0
        %1254 = vmatprep.subr.mxu0 0.0
        %1255 = vmatpush1.msra.mxu0 0.0
        %1256 = vmatprep.subr.mxu0 0.0
        %1257 = vmatpush1.msra.mxu0 0.0
        %1258 = vmatprep.subr.mxu0 0.0
        %1259 = vmatpush1.msra.mxu0 0.0
        %1260 = vmatprep.subr.mxu0 0.0
        %1261 = vmatpush1.msra.mxu0 0.0
        %1262 = vmatprep.subr.mxu0 0.0
        %1263 = vmatpush1.msra.mxu0 0.0
        %1264 = vmatprep.subr.mxu0 0.0
        %1265 = vmatpush1.msra.mxu0 0.0
        %1266 = vmatprep.subr.mxu0 0.0
        %1267 = vmatpush1.msra.mxu0 0.0
        %1268 = vmatprep.subr.mxu0 0.0
        %1269 = vmatpush1.msra.mxu0 0.0
        %1270 = vmatprep.subr.mxu0 0.0
        %1271 = vmatpush1.msra.mxu0 0.0
        %1272 = vmatprep.subr.mxu0 0.0
        %1273 = vmatpush1.msra.mxu0 0.0
        %1274 = vmatprep.subr.mxu0 0.0
        %1275 = vmatpush1.msra.mxu0 0.0
        %1276 = vmatprep.subr.mxu0 0.0
        %1277 = vmatpush1.msra.mxu0 0.0
        %1278 = vmatprep.subr.mxu0 0.0
        %1279 = vmatpush1.msra.mxu0 0.0
        %1280 = vmatprep.subr.mxu0 0.0
        %1281 = vmatpush1.msra.mxu0 0.0
        %1282 = vmatprep.subr.mxu0 0.0
        %1283 = vmatpush1.msra.mxu0 0.0
        %1284 = vmatprep.subr.mxu0 0.0
        %1285 = vmatpush1.msra.mxu0 0.0
        %1286 = vmatprep.subr.mxu0 0.0
        %1287 = vmatpush1.msra.mxu0 0.0
        %1288 = vmatprep.subr.mxu0 0.0
        %1289 = vmatpush1.msra.mxu0 0.0
        %1290 = vmatprep.subr.mxu0 0.0
        %1291 = vmatpush1.msra.mxu0 0.0
        %1292 = vmatprep.subr.mxu0 0.0
        %1293 = vmatpush1.msra.mxu0 0.0
        %1294 = vmatprep.subr.mxu0 0.0
        %1295 = vmatpush1.msra.mxu0 0.0
        %1296 = vmatprep.subr.mxu0 0.0
        %1297 = vmatpush1.msra.mxu0 0.0
        %1298 = vmatprep.subr.mxu0 0.0
        %1299 = vmatpush1.msra.mxu0 0.0
        %1300 = vmatprep.subr.mxu0 0.0
        %1301 = vmatpush1.msra.mxu0 0.0
        %1302 = vmatprep.subr.mxu0 0.0
        %1303 = vmatpush1.msra.mxu0 0.0
        %1304 = vmatprep.subr.mxu0 0.0
        %1305 = vmatpush1.msra.mxu0 0.0
        %1306 = vmatprep.subr.mxu0 0.0
        %1307 = vmatpush1.msra.mxu0 0.0
        %1308 = vmatprep.subr.mxu0 0.0
        %1309 = vmatpush1.msra.mxu0 0.0
        %1310 = vmatprep.mubr.f32.mxu0 0.0
        %1311 = vmatmul.mubr.f32.gmra.mrb[0].mxu0 %v1220
        %v1312 = vpop.f32.mrb[0].mxu0
        %v1313 = vadd.f32 0.0, %v1312
        %v1314 = vpop.f32.mrb[0].mxu0
        %1315 = vmatprep.mubr.f32.mxu0 0.0
        %1316 = vmatmul.mubr.f32.gmra.mrb[0].mxu0 %v1223
        %v1317 = vpop.f32.mrb[0].mxu0
        %v1318 = vadd.f32 0.0, %v1317
        %v1319 = vpop.f32.mrb[0].mxu0
        %1320 = vmatprep.mubr.f32.mxu0 0.0
        %1321 = vmatmul.mubr.f32.gmra.mrb[0].mxu0 %v1226
        %v1322 = vpop.f32.mrb[0].mxu0
        %v1323 = vadd.f32 0.0, %v1322
        %v1324 = vpop.f32.mrb[0].mxu0
        %1325 = vmatprep.mubr.f32.mxu0 0.0
        %1326 = vmatmul.mubr.f32.gmra.mrb[0].mxu0 %v1229
        %v1327 = vpop.f32.mrb[0].mxu0
        %v1328 = vadd.f32 0.0, %v1327
        %v1329 = vpop.f32.mrb[0].mxu0
        %1330 = vmatprep.mubr.f32.mxu0 0.0
        %1331 = vmatmul.mubr.f32.gmra.mrb[0].mxu0 %v1232
        %v1332 = vpop.f32.mrb[0].mxu0
        %v1333 = vadd.f32 0.0, %v1332
        %v1334 = vpop.f32.mrb[0].mxu0
        %1335 = vmatprep.mubr.f32.mxu0 0.0
        %1336 = vmatmul.mubr.f32.gmra.mrb[0].mxu0 %v1235
        %v1337 = vpop.f32.mrb[0].mxu0
        %v1338 = vadd.f32 0.0, %v1337
        %v1339 = vpop.f32.mrb[0].mxu0
        %1340 = vmatprep.mubr.f32.mxu0 0.0
        %1341 = vmatmul.mubr.f32.gmra.mrb[0].mxu0 %v1238
        %v1342 = vpop.f32.mrb[0].mxu0
        %v1343 = vadd.f32 0.0, %v1342
        %v1344 = vpop.f32.mrb[0].mxu0
        %1345 = vmatprep.mubr.f32.mxu0 0.0
        %1346 = vmatmul.mubr.f32.gmra.mrb[0].mxu0 %v1241
        %v1347 = vpop.f32.mrb[0].mxu0
        %v1348 = vadd.f32 0.0, %v1347
        %v1349 = vpop.f32.mrb[0].mxu0
        %1350 = vdwg.mxu0
        %v1351 = vadd.f32 %v1200, %v1313
        %v1352 = vadd.f32 %v1201, %v1318
        %v1353 = vadd.f32 %v1202, %v1323
        %v1354 = vadd.f32 %v1203, %v1328
        %v1355 = vadd.f32 %v1204, %v1333
        %v1356 = vadd.f32 %v1205, %v1338
        %v1357 = vadd.f32 %v1206, %v1343
        %v1358 = vadd.f32 %v1207, %v1348
        %v1359 = vld [vmem:[%s1057 + $0x1] sm:$0xff]
        %v1360 = vld [vmem:[%s1057 + $0x11] sm:$0xff]
        %v1361 = vld [vmem:[%s1057 + $0x21] sm:$0xff]
        %v1362 = vld [vmem:[%s1057 + $0x31] sm:$0xff]
        %v1363 = vld [vmem:[%s1057 + $0x41] sm:$0xff]
        %v1364 = vld [vmem:[%s1057 + $0x51] sm:$0xff]
        %v1365 = vld [vmem:[%s1057 + $0x61] sm:$0xff]
        %v1366 = vld [vmem:[%s1057 + $0x71] sm:$0xff]
        %s1367 = scalar_lea.vmem %s1, 32
        %v1368 = vld [vmem:[%s1367] sm:$0xf]
        %v1370 = vsel %vm189, %v1359, 0
        %v1373 = vsel %vm189, %v1360, 0
        %v1376 = vsel %vm189, %v1361, 0
        %v1379 = vsel %vm189, %v1362, 0
        %v1382 = vsel %vm189, %v1363, 0
        %v1385 = vsel %vm189, %v1364, 0
        %v1388 = vsel %vm189, %v1365, 0
        %v1391 = vsel %vm189, %v1366, 0
        %v1394 = vsel %vm214, %v1368, 0
        %1396 = vmatprep.subr.mxu0 0.0
        %1397 = vmatpush1.msra.mxu0 %v1394
        %1398 = vmatprep.subr.mxu0 0.0
        %1399 = vmatpush1.msra.mxu0 0.0
        %1400 = vmatprep.subr.mxu0 0.0
        %1401 = vmatpush1.msra.mxu0 0.0
        %1402 = vmatprep.subr.mxu0 0.0
        %1403 = vmatpush1.msra.mxu0 0.0
        %1404 = vmatprep.subr.mxu0 0.0
        %1405 = vmatpush1.msra.mxu0 0.0
        %1406 = vmatprep.subr.mxu0 0.0
        %1407 = vmatpush1.msra.mxu0 0.0
        %1408 = vmatprep.subr.mxu0 0.0
        %1409 = vmatpush1.msra.mxu0 0.0
        %1410 = vmatprep.subr.mxu0 0.0
        %1411 = vmatpush1.msra.mxu0 0.0
        %1412 = vmatprep.subr.mxu0 0.0
        %1413 = vmatpush1.msra.mxu0 0.0
        %1414 = vmatprep.subr.mxu0 0.0
        %1415 = vmatpush1.msra.mxu0 0.0
        %1416 = vmatprep.subr.mxu0 0.0
        %1417 = vmatpush1.msra.mxu0 0.0
        %1418 = vmatprep.subr.mxu0 0.0
        %1419 = vmatpush1.msra.mxu0 0.0
        %1420 = vmatprep.subr.mxu0 0.0
        %1421 = vmatpush1.msra.mxu0 0.0
        %1422 = vmatprep.subr.mxu0 0.0
        %1423 = vmatpush1.msra.mxu0 0.0
        %1424 = vmatprep.subr.mxu0 0.0
        %1425 = vmatpush1.msra.mxu0 0.0
        %1426 = vmatprep.subr.mxu0 0.0
        %1427 = vmatpush1.msra.mxu0 0.0
        %1428 = vmatprep.subr.mxu0 0.0
        %1429 = vmatpush1.msra.mxu0 0.0
        %1430 = vmatprep.subr.mxu0 0.0
        %1431 = vmatpush1.msra.mxu0 0.0
        %1432 = vmatprep.subr.mxu0 0.0
        %1433 = vmatpush1.msra.mxu0 0.0
        %1434 = vmatprep.subr.mxu0 0.0
        %1435 = vmatpush1.msra.mxu0 0.0
        %1436 = vmatprep.subr.mxu0 0.0
        %1437 = vmatpush1.msra.mxu0 0.0
        %1438 = vmatprep.subr.mxu0 0.0
        %1439 = vmatpush1.msra.mxu0 0.0
        %1440 = vmatprep.subr.mxu0 0.0
        %1441 = vmatpush1.msra.mxu0 0.0
        %1442 = vmatprep.subr.mxu0 0.0
        %1443 = vmatpush1.msra.mxu0 0.0
        %1444 = vmatprep.subr.mxu0 0.0
        %1445 = vmatpush1.msra.mxu0 0.0
        %1446 = vmatprep.subr.mxu0 0.0
        %1447 = vmatpush1.msra.mxu0 0.0
        %1448 = vmatprep.subr.mxu0 0.0
        %1449 = vmatpush1.msra.mxu0 0.0
        %1450 = vmatprep.subr.mxu0 0.0
        %1451 = vmatpush1.msra.mxu0 0.0
        %1452 = vmatprep.subr.mxu0 0.0
        %1453 = vmatpush1.msra.mxu0 0.0
        %1454 = vmatprep.subr.mxu0 0.0
        %1455 = vmatpush1.msra.mxu0 0.0
        %1456 = vmatprep.subr.mxu0 0.0
        %1457 = vmatpush1.msra.mxu0 0.0
        %1458 = vmatprep.subr.mxu0 0.0
        %1459 = vmatpush1.msra.mxu0 0.0
        %1460 = vmatprep.mubr.f32.mxu0 0.0
        %1461 = vmatmul.mubr.f32.gmra.mrb[0].mxu0 %v1370
        %v1462 = vpop.f32.mrb[0].mxu0
        %v1463 = vadd.f32 0.0, %v1462
        %v1464 = vpop.f32.mrb[0].mxu0
        %1465 = vmatprep.mubr.f32.mxu0 0.0
        %1466 = vmatmul.mubr.f32.gmra.mrb[0].mxu0 %v1373
        %v1467 = vpop.f32.mrb[0].mxu0
        %v1468 = vadd.f32 0.0, %v1467
        %v1469 = vpop.f32.mrb[0].mxu0
        %1470 = vmatprep.mubr.f32.mxu0 0.0
        %1471 = vmatmul.mubr.f32.gmra.mrb[0].mxu0 %v1376
        %v1472 = vpop.f32.mrb[0].mxu0
        %v1473 = vadd.f32 0.0, %v1472
        %v1474 = vpop.f32.mrb[0].mxu0
        %1475 = vmatprep.mubr.f32.mxu0 0.0
        %1476 = vmatmul.mubr.f32.gmra.mrb[0].mxu0 %v1379
        %v1477 = vpop.f32.mrb[0].mxu0
        %v1478 = vadd.f32 0.0, %v1477
        %v1479 = vpop.f32.mrb[0].mxu0
        %1480 = vmatprep.mubr.f32.mxu0 0.0
        %1481 = vmatmul.mubr.f32.gmra.mrb[0].mxu0 %v1382
        %v1482 = vpop.f32.mrb[0].mxu0
        %v1483 = vadd.f32 0.0, %v1482
        %v1484 = vpop.f32.mrb[0].mxu0
        %1485 = vmatprep.mubr.f32.mxu0 0.0
        %1486 = vmatmul.mubr.f32.gmra.mrb[0].mxu0 %v1385
        %v1487 = vpop.f32.mrb[0].mxu0
        %v1488 = vadd.f32 0.0, %v1487
        %v1489 = vpop.f32.mrb[0].mxu0
        %1490 = vmatprep.mubr.f32.mxu0 0.0
        %1491 = vmatmul.mubr.f32.gmra.mrb[0].mxu0 %v1388
        %v1492 = vpop.f32.mrb[0].mxu0
        %v1493 = vadd.f32 0.0, %v1492
        %v1494 = vpop.f32.mrb[0].mxu0
        %1495 = vmatprep.mubr.f32.mxu0 0.0
        %1496 = vmatmul.mubr.f32.gmra.mrb[0].mxu0 %v1391
        %v1497 = vpop.f32.mrb[0].mxu0
        %v1498 = vadd.f32 0.0, %v1497
        %v1499 = vpop.f32.mrb[0].mxu0
        %1500 = vdwg.mxu0
        %v1501 = vadd.f32 %v1351, %v1463
        %v1502 = vadd.f32 %v1352, %v1468
        %v1503 = vadd.f32 %v1353, %v1473
        %v1504 = vadd.f32 %v1354, %v1478
        %v1505 = vadd.f32 %v1355, %v1483
        %v1506 = vadd.f32 %v1356, %v1488
        %v1507 = vadd.f32 %v1357, %v1493
        %v1508 = vadd.f32 %v1358, %v1498
        %v1509 = vld [vmem:[%s2] sm:$0x1]
        %v1511 = vlaneseq
        %v1512 = vshrl.u32 %v1511, 7
        %v1513 = vsub.s32 0, %v1512
        %v1514 = vrot.slane %v1509, %v1513
        %v1516 = vadd.f32 %v1501, %v1514
        %v1517 = vadd.f32 %v1502, %v1514
        %v1518 = vadd.f32 %v1503, %v1514
        %v1519 = vadd.f32 %v1504, %v1514
        %v1520 = vadd.f32 %v1505, %v1514
        %v1521 = vadd.f32 %v1506, %v1514
        %v1522 = vadd.f32 %v1507, %v1514
        %v1523 = vadd.f32 %v1508, %v1514
        %v1524 = vmax.f32 %v1516, 0.0
        %v1525 = vmax.f32 %v1517, 0.0
        %v1526 = vmax.f32 %v1518, 0.0
        %v1527 = vmax.f32 %v1519, 0.0
        %v1528 = vmax.f32 %v1520, 0.0
        %v1529 = vmax.f32 %v1521, 0.0
        %v1530 = vmax.f32 %v1522, 0.0
        %v1531 = vmax.f32 %v1523, 0.0
        %vm1532 = vcmask 64512
        %1533 = vst.msk [vmem:[%s163] sm:$0xff] %vm1532, %v1524
        %1534 = vst.msk [vmem:[%s163 + $0x8] sm:$0xff] %vm1532, %v1525
        %1535 = vst.msk [vmem:[%s163 + $0x10] sm:$0xff] %vm1532, %v1526
        %1536 = vst.msk [vmem:[%s163 + $0x18] sm:$0xff] %vm1532, %v1527
        %1537 = vst.msk [vmem:[%s163 + $0x20] sm:$0xff] %vm1532, %v1528
        %1538 = vst.msk [vmem:[%s163 + $0x28] sm:$0xff] %vm1532, %v1529
        %1539 = vst.msk [vmem:[%s163 + $0x30] sm:$0xff] %vm1532, %v1530
        %1540 = vst.msk [vmem:[%s163 + $0x38] sm:$0xff] %vm1532, %v1531
        %s1541 = sand.u32 %s93, 1
        %s1542 = scalar_lea.sflag [#allocation3], %s1541
        %s1543 = sand.u32 %s93, 1
        %s1544 = smul.addr %s1543, 64
        %s1545 = scalar_lea.vmem [#allocation2], %s1544
        // Predicated region
        $region33: #{tpu_custom_call.1} parent=31 // pred_check
          %p1546 = pneg %p103
        $region34: #{tpu_custom_call.1} parent=31 // pred_check_branch
          %1548 = sbr.rel (%p1546) target = $region36
        $region35: #{tpu_custom_call.1} parent=31 // pred_region
          %s1550 = ssub.s32 1024, 1024
          %1551 = vsyncadd %s1542, %s1550
          %s1552 = smul.addr %s17, 8
          %s1553 = smul.addr %s1552, 128
          %s1554 = scalar_lea.hbm %s3, %s1553
          %s1555 = sshll.u32 %s1545, 4
          %s1556 = int_to_ptr.vmem [resolvable:$true] %s1555
          %1561 = dma.vmem_to_hbm [thread:$0]  %s1556, 1024, %s1554, %s1542, 128, 128, 8
        $region36: #{tpu_custom_call.1} parent=31 // pred_fallthru
          _
      $region32: #{tpu_custom_call.1} parent=5 // pred_fallthru
        _
      %p1562 = scmp.le.s32.totalorder 2, %s12
      // Predicated region
      $region37: #{tpu_custom_call.1} parent=5 // pred_check
        %p1563 = pneg %p1562
      $region38: #{tpu_custom_call.1} parent=5 // pred_check_branch
        %1565 = sbr.rel (%p1563) target = $region40
      $region39: #{tpu_custom_call.1} parent=5 // pred_region
        %s1566 = ssub.s32 %s12, 2
        // Predicated region
        $region41: #{tpu_custom_call.1} parent=39 // pred_check
          %p1567 = pneg %p109
        $region42: #{tpu_custom_call.1} parent=39 // pred_check_branch
          %1569 = sbr.rel (%p1567) target = $region44
        $region43: #{tpu_custom_call.1} parent=39 // pred_region
          %s1570 = sand.u32 %s94, 1
          %s1571 = scalar_lea.sflag [#allocation3], %s1570
          %s1572 = sand.u32 %s94, 1
          %s1573 = smul.addr %s1572, 64
          %s1574 = scalar_lea.vmem [#allocation2], %s1573
          %1575 = dma.done %s1571, 1024
        $region44: #{tpu_custom_call.1} parent=39 // pred_fallthru
          _
      $region40: #{tpu_custom_call.1} parent=5 // pred_fallthru
        _
    $region6: #{tpu_custom_call.1} parent=1 // loop_footer
      %s16 = sadd.s32 1, %s12
    $region7: #{tpu_custom_call.1} parent=1 // loop_footer_branch
      %11 = sbr.rel target = $region3
    $region8: #{tpu_custom_call.1} parent=1 // loop_exit
      _
    %1576 = vsyncpa [#allocation3], 1
    %s1577 = scalar_lea.sflag [#allocation3], 1
    %1578 = vsyncpa %s1577, 1

</llo_original>
